<compile_context>
chip_gen: v7x
topology: tpu7x:2x2x1
jax: 0.10.0
libtpu: 0.0.40
codegen_flags: <defaults>
</compile_context>

<pallas_src>
import math

import jax
import jax.numpy as jnp
from jax.experimental import pallas as pl
from jax.experimental.pallas import tpu as pltpu

PAD_TOKEN_ID = 0
B = 2        # batch
L = 8        # sequence length
H = 32       # hidden size
FF = 128     # FFN intermediate size
V = 128      # vocab size
N_MLM = 6    # number of True entries in is_mlm_applied (fixed -> static shapes)
BL = B * L
VEC_W = 128  # width of the packed bias/LN parameter slab (= max(FF, V, 3H))

# rows inside the packed parameter slab ---------------------------------------
R_EMB_G, R_EMB_B = 0, 1            # embedding LayerNorm gamma / beta
R_BQKV, R_BO = 2, 3                # fused qkv bias (3H), attn-output bias (H)
R_LN1G, R_LN1B = 4, 5              # post-attention LayerNorm
R_B1, R_B2 = 6, 7                  # FFN biases (FF, H)
R_LN2G, R_LN2B = 8, 9              # post-FFN LayerNorm
# generator head rows
R_GBD, R_GLNG, R_GLNB, R_GBV = 10, 11, 12, 13
# discriminator head rows
R_DBD, R_DWP, R_DBP = 10, 11, 12


# --------------------------- in-kernel helpers -------------------------------

def _gelu(x):
    # tanh approximation (EUP friendly inside Pallas)
    c = math.sqrt(2.0 / math.pi)
    return 0.5 * x * (1.0 + jnp.tanh(c * (x + 0.044715 * x * x * x)))


def _layer_norm(x, g, b, eps=1e-12):
    mu = jnp.mean(x, axis=-1, keepdims=True)
    var = jnp.mean((x - mu) ** 2, axis=-1, keepdims=True)
    return (x - mu) * jax.lax.rsqrt(var + eps) * g + b


def _bf16(x):
    return x.astype(jnp.bfloat16)


def _embed_encode(ids_ref, pt_ref, bias_ref, emb_ref,
                  wqkv_ref, wo_ref, w1_ref, w2_ref, vec_ref):
    """word-embedding lookup + embedding LN + 1-layer encoder over (B*L, H) rows."""
    n = ids_ref.shape[0]

    # word embedding lookup as a one-hot matmul (exact gather, MXU friendly)
    ids = ids_ref[...]                                              # (BL, 1) int32
    iota_v = jax.lax.broadcasted_iota(jnp.int32, (n, V), 1)
    onehot = (iota_v == ids).astype(jnp.bfloat16)                   # (BL, V)
    x = jnp.dot(onehot, emb_ref[...], preferred_element_type=jnp.float32)
    x = x + pt_ref[...]                                             # + pos + type
    x = _layer_norm(x, vec_ref[R_EMB_G:R_EMB_G + 1, :H],
                    vec_ref[R_EMB_B:R_EMB_B + 1, :H])

    # fused QKV projection: one (BL,H)x(H,3H) matmul
    qkv = jnp.dot(_bf16(x), wqkv_ref[...],
                  preferred_element_type=jnp.float32) + vec_ref[R_BQKV:R_BQKV + 1, :3 * H]
    q = qkv[:, 0:H]
    k = qkv[:, H:2 * H]
    v = qkv[:, 2 * H:3 * H]

    # scores = q @ k^T without an explicit transpose (contract last axes)
    scores = jax.lax.dot_general(_bf16(q), _bf16(k), (((1,), (1,)), ((), ())),
                                 preferred_element_type=jnp.float32)
    scores = scores * (1.0 / math.sqrt(H)) + bias_ref[...]          # (BL, BL)
    scores = scores - jnp.max(scores, axis=-1, keepdims=True)
    p = jnp.exp(scores)
    p = p * pl.reciprocal(jnp.sum(p, axis=-1, keepdims=True), approx=True)

    ctx = jnp.dot(_bf16(p), _bf16(v), preferred_element_type=jnp.float32)
    attn = jnp.dot(_bf16(ctx), wo_ref[...],
                   preferred_element_type=jnp.float32) + vec_ref[R_BO:R_BO + 1, :H]
    h = _layer_norm(x + attn, vec_ref[R_LN1G:R_LN1G + 1, :H],
                    vec_ref[R_LN1B:R_LN1B + 1, :H])

    ff = _gelu(jnp.dot(_bf16(h), w1_ref[...],
                       preferred_element_type=jnp.float32) + vec_ref[R_B1:R_B1 + 1, :FF])
    ff = jnp.dot(_bf16(ff), w2_ref[...],
                 preferred_element_type=jnp.float32) + vec_ref[R_B2:R_B2 + 1, :H]
    return _layer_norm(h + ff, vec_ref[R_LN2G:R_LN2G + 1, :H],
                       vec_ref[R_LN2B:R_LN2B + 1, :H])


# ------------------------------ Pallas kernels --------------------------------

def generator_kernel(ids_ref, pt_ref, bias_ref, sel_ref, gumbel_ref,
                     emb_ref, wqkv_ref, wo_ref, w1_ref, w2_ref,
                     hwd_ref, hwv_ref, vec_ref,
                     logits_ref, toks_ref):
    h = _embed_encode(ids_ref, pt_ref, bias_ref, emb_ref,
                      wqkv_ref, wo_ref, w1_ref, w2_ref, vec_ref)

    # gather only the N_MLM masked rows via a one-hot selection matmul
    hm = jnp.dot(sel_ref[...], _bf16(h), preferred_element_type=jnp.float32)

    # MLM head: dense + gelu + LN + vocab projection (only N_MLM rows)
    t = _gelu(jnp.dot(_bf16(hm), hwd_ref[...],
                      preferred_element_type=jnp.float32) + vec_ref[R_GBD:R_GBD + 1, :H])
    t = _layer_norm(t, vec_ref[R_GLNG:R_GLNG + 1, :H], vec_ref[R_GLNB:R_GLNB + 1, :H])
    logits = jnp.dot(_bf16(t), hwv_ref[...],
                     preferred_element_type=jnp.float32) + vec_ref[R_GBV:R_GBV + 1, :V]
    logits_ref[...] = logits                                         # (N_MLM, V) f32

    # fp32_gumbel sampling: argmax(logits + gumbel), first-max index
    x = logits + gumbel_ref[...]
    m = jnp.max(x, axis=-1, keepdims=True)
    vidx = jax.lax.broadcasted_iota(jnp.int32, x.shape, 1)
    toks_ref[...] = jnp.min(jnp.where(x == m, vidx, V), axis=-1, keepdims=True)


def discriminator_kernel(ids_ref, pt_ref, bias_ref,
                         emb_ref, wqkv_ref, wo_ref, w1_ref, w2_ref,
                         hwd_ref, vec_ref, out_ref):
    h = _embed_encode(ids_ref, pt_ref, bias_ref, emb_ref,
                      wqkv_ref, wo_ref, w1_ref, w2_ref, vec_ref)
    t = _gelu(jnp.dot(_bf16(h), hwd_ref[...],
                      preferred_element_type=jnp.float32) + vec_ref[R_DBD:R_DBD + 1, :H])
    wp = vec_ref[R_DWP:R_DWP + 1, :H]                                # (1, H)
    bp = vec_ref[R_DBP:R_DBP + 1, 0:1]                               # (1, 1)
    out_ref[...] = jnp.sum(t * wp, axis=-1, keepdims=True) + bp      # (BL, 1)


# ------------------------------- wrappers --------------------------------------

def generator_call(ids_col, pos_type, attn_bias, sel, gumbel, p):
    return pl.pallas_call(
        generator_kernel,
        out_shape=(jax.ShapeDtypeStruct((N_MLM, V), jnp.float32),
                   jax.ShapeDtypeStruct((N_MLM, 1), jnp.int32)),
    )(ids_col, pos_type, attn_bias, sel, gumbel,
      p["word"], p["wqkv"], p["wo"], p["w1"], p["w2"],
      p["head_wd"], p["head_wv"], p["vec"])


def discriminator_call(ids_col, pos_type, attn_bias, p):
    return pl.pallas_call(
        discriminator_kernel,
        out_shape=jax.ShapeDtypeStruct((BL, 1), jnp.float32),
    )(ids_col, pos_type, attn_bias,
      p["word"], p["wqkv"], p["wo"], p["w1"], p["w2"],
      p["head_wd"], p["vec"])


# --------------------------- parameters (synthetic) ----------------------------

def _pack_rows(rows):
    slab = jnp.zeros((len(rows), VEC_W), jnp.float32)
    for i, r in enumerate(rows):
        r = jnp.asarray(r, jnp.float32).reshape(-1)
        slab = slab.at[i, : r.shape[0]].set(r)
    return slab


def _init_tower(key, kind):
    ks = jax.random.split(key, 11)
    s = 0.05
    word = s * jax.random.normal(ks[0], (V, H), jnp.float32)
    pos = s * jax.random.normal(ks[1], (L, H), jnp.float32)
    typ = s * jax.random.normal(ks[2], (2, H), jnp.float32)
    wq = s * jax.random.normal(ks[3], (H, H), jnp.float32)
    wk = s * jax.random.normal(ks[4], (H, H), jnp.float32)
    wv = s * jax.random.normal(ks[5], (H, H), jnp.float32)
    wo = s * jax.random.normal(ks[6], (H, H), jnp.float32)
    w1 = s * jax.random.normal(ks[7], (H, FF), jnp.float32)
    w2 = s * jax.random.normal(ks[8], (FF, H), jnp.float32)
    head_wd = s * jax.random.normal(ks[9], (H, H), jnp.float32)
    wqkv = jnp.concatenate([wq, wk, wv], axis=1)                    # (H, 3H)

    zeros_h = jnp.zeros((H,), jnp.float32)
    ones_h = jnp.ones((H,), jnp.float32)
    rows = [ones_h, zeros_h,                 # embedding LN gamma / beta
            jnp.zeros((3 * H,), jnp.float32),  # fused qkv bias
            zeros_h, ones_h, zeros_h,        # attn-out bias, LN1 gamma/beta
            jnp.zeros((FF,), jnp.float32), zeros_h,  # FFN biases
            ones_h, zeros_h]                 # LN2 gamma/beta

    extra = {}
    if kind == "gen":
        head_wv = s * jax.random.normal(ks[10], (H, V), jnp.float32)
        rows += [zeros_h, ones_h, zeros_h,            # head bias, head LN gamma/beta
                 jnp.zeros((V,), jnp.float32)]        # vocab bias
        extra["head_wv"] = head_wv.astype(jnp.bfloat16)
    else:
        head_wp = s * jax.random.normal(ks[10], (H,), jnp.float32)
        rows += [zeros_h, head_wp, jnp.zeros((1,), jnp.float32)]   # head bias, wp, bp

    return {"word": word.astype(jnp.bfloat16),
            "pos": pos, "type": typ,
            "wqkv": wqkv.astype(jnp.bfloat16),
            "wo": wo.astype(jnp.bfloat16),
            "w1": w1.astype(jnp.bfloat16),
            "w2": w2.astype(jnp.bfloat16),
            "head_wd": head_wd.astype(jnp.bfloat16),
            "vec": _pack_rows(rows),
            **extra}


def init_params(key):
    kg, kd = jax.random.split(key)
    return {"gen": _init_tower(kg, "gen"), "disc": _init_tower(kd, "disc")}


# ------------------------------ ELECTRA forward --------------------------------

def electra_forward(params, masked_inputs, sentA_lenths, is_mlm_applied, labels, gumbel):
    # _get_pad_mask_and_token_type
    attention_mask = masked_inputs != PAD_TOKEN_ID                          # (B, L) bool
    token_type_ids = (jnp.arange(L)[None, :] >= sentA_lenths[:, None]).astype(jnp.int32)

    # block-diagonal additive attention bias over the flattened (B*L) rows:
    # a query may only attend to non-pad keys of its own example.
    ex_id = jnp.arange(BL, dtype=jnp.int32) // L
    key_ok = attention_mask.reshape(-1)
    allowed = (ex_id[:, None] == ex_id[None, :]) & key_ok[None, :]
    attn_bias = jnp.where(allowed, 0.0, -1e9).astype(jnp.float32)           # (BL, BL)

    # per-token pos + type additive embedding term (tiny plain-JAX glue)
    tt_flat = token_type_ids.reshape(-1)

    def pos_type_term(p):
        pos = jnp.tile(p["pos"], (B, 1))                                    # (BL, H)
        typ = jnp.where(tt_flat[:, None] == 0, p["type"][0], p["type"][1])  # (BL, H)
        return (pos + typ).astype(jnp.float32)

    # masked-position selection (fixed count -> static shapes)
    flat_mlm = is_mlm_applied.reshape(-1)
    flat_idx = jnp.nonzero(flat_mlm, size=N_MLM)[0]
    sel = jax.nn.one_hot(flat_idx, BL, dtype=jnp.bfloat16)                  # (N_MLM, BL)

    # generator (fused: embedding + encoder + mlm-row gather + head + gumbel argmax)
    ids_col = masked_inputs.reshape(-1, 1).astype(jnp.int32)
    mlm_gen_logits, pred_col = generator_call(
        ids_col, pos_type_term(params["gen"]), attn_bias, sel, gumbel, params["gen"])
    pred_toks = pred_col[:, 0]                                              # (N_MLM,) int32

    # replace sampled tokens / build is_replaced (torch.no_grad block)
    generated = masked_inputs.reshape(-1).at[flat_idx].set(pred_toks).reshape(B, L)
    labels_at_mlm = labels.reshape(-1)[flat_idx]
    is_replaced = flat_mlm.at[flat_idx].set(pred_toks != labels_at_mlm).reshape(B, L)

    # discriminator (fused: embedding + encoder + per-token head)
    gen_ids_col = generated.reshape(-1, 1).astype(jnp.int32)
    disc_col = discriminator_call(gen_ids_col, pos_type_term(params["disc"]),
                                  attn_bias, params["disc"])
    disc_logits = disc_col.reshape(B, L)

    return (mlm_gen_logits, generated, disc_logits, is_replaced,
            attention_mask, is_mlm_applied)


# ----------------------------------- main ---------------------------------------

if __name__ == "__main__":
    key = jax.random.PRNGKey(0)
    k_par, k_ids, k_lab, k_gum = jax.random.split(key, 4)

    params = init_params(k_par)

    masked_inputs = jax.random.randint(k_ids, (B, L), 1, V).astype(jnp.int32)
    masked_inputs = masked_inputs.at[1, 6:].set(PAD_TOKEN_ID)               # pad tail of row 1
    sentA_lenths = jnp.array([5, 3], dtype=jnp.int32)

    # fixed set of N_MLM masked positions (row-major unique, none on pad)
    mlm_positions = jnp.array([[0, 2], [0, 5], [0, 6], [1, 1], [1, 3], [1, 4]],
                              dtype=jnp.int32)
    is_mlm_applied = jnp.zeros((B, L), dtype=bool).at[
        mlm_positions[:, 0], mlm_positions[:, 1]].set(True)

    labels = jnp.full((B, L), -100, dtype=jnp.int32)
    labels = labels.at[mlm_positions[:, 0], mlm_positions[:, 1]].set(
        jax.random.randint(k_lab, (N_MLM,), 1, V).astype(jnp.int32))

    # standard gumbel noise for the fp32_gumbel sampling path
    gumbel = jax.random.gumbel(k_gum, (N_MLM, V), dtype=jnp.float32)

    outs = jax.jit(electra_forward)(params, masked_inputs, sentA_lenths,
                                    is_mlm_applied, labels, gumbel)
    jax.block_until_ready(outs)

    mlm_gen_logits, generated, disc_logits, is_replaced, attention_mask, mlm_mask = outs
    assert mlm_gen_logits.shape == (N_MLM, V) and mlm_gen_logits.dtype == jnp.float32
    assert generated.shape == (B, L) and generated.dtype == jnp.int32
    assert disc_logits.shape == (B, L) and disc_logits.dtype == jnp.float32
    assert is_replaced.shape == (B, L) and is_replaced.dtype == jnp.bool_
    assert attention_mask.shape == (B, L) and attention_mask.dtype == jnp.bool_
    assert mlm_mask.shape == (B, L) and mlm_mask.dtype == jnp.bool_

    print("KERNEL_OK")
</pallas_src>

<mosaic_0001>
module attributes {stable_mosaic.version = 11 : i64} {
  func.func private @main(%arg0: i32) attributes {dimension_semantics = [#tpu.dimension_semantics<core_parallel>], iteration_bounds = array<i64: 2>, tpu.core_type = #tpu.core_type<sc_scalar_subcore>, window_params = []} {
    return
  }
}

module attributes {stable_mosaic.version = 11 : i64} {
  func.func private @main(%arg0: i32) attributes {dimension_semantics = [#tpu.dimension_semantics<core_parallel>], iteration_bounds = array<i64: 2>, tpu.core_type = #tpu.core_type<sc_scalar_subcore>, window_params = []} {
    return
  }
}

module attributes {stable_mosaic.version = 11 : i64} {
  func.func @discriminator_kernel(%arg0: memref<16x1xi32, #tpu.memory_space<vmem>>, %arg1: memref<16x32xf32, #tpu.memory_space<vmem>>, %arg2: memref<16x16xf32, #tpu.memory_space<vmem>>, %arg3: memref<128x32xbf16, #tpu.memory_space<vmem>>, %arg4: memref<32x96xbf16, #tpu.memory_space<vmem>>, %arg5: memref<32x32xbf16, #tpu.memory_space<vmem>>, %arg6: memref<32x128xbf16, #tpu.memory_space<vmem>>, %arg7: memref<128x32xbf16, #tpu.memory_space<vmem>>, %arg8: memref<32x32xbf16, #tpu.memory_space<vmem>>, %arg9: memref<13x128xf32, #tpu.memory_space<vmem>>, %arg10: memref<16x1xf32, #tpu.memory_space<vmem>>) attributes {dimension_semantics = [], scalar_prefetch = 0 : i64, scratch_operands = 0 : i64, tpu.core_type = #tpu.core_type<tc>} {
    %c0 = arith.constant 0 : index
    %c0_0 = arith.constant 0 : index
    %0 = vector.load %arg0[%c0, %c0_0] : memref<16x1xi32, #tpu.memory_space<vmem>>, vector<16x1xi32>
    %1 = tpu.iota {dimensions = array<i32: 1>} : vector<16x128xi32>
    %2 = vector.broadcast %0 : vector<16x1xi32> to vector<16x128xi32>
    %3 = arith.cmpi eq, %1, %2 : vector<16x128xi32>
    %4 = arith.extui %3 : vector<16x128xi1> to vector<16x128xi32>
    %5 = arith.sitofp %4 : vector<16x128xi32> to vector<16x128xf32>
    %6 = arith.truncf %5 : vector<16x128xf32> to vector<16x128xbf16>
    %c0_1 = arith.constant 0 : index
    %c0_2 = arith.constant 0 : index
    %7 = vector.load %arg3[%c0_1, %c0_2] : memref<128x32xbf16, #tpu.memory_space<vmem>>, vector<128x32xbf16>
    %cst = arith.constant dense<0.000000e+00> : vector<16x32xf32>
    %8 = tpu.matmul %6, %7, %cst {dimension_numbers = #tpu.dot_dimension_numbers<[1], [0], [0], [1], [0, 0, 1, 1], [], []>} : vector<16x128xbf16>, vector<128x32xbf16>, vector<16x32xf32> -> vector<16x32xf32>
    %c0_3 = arith.constant 0 : index
    %c0_4 = arith.constant 0 : index
    %9 = vector.load %arg1[%c0_3, %c0_4] : memref<16x32xf32, #tpu.memory_space<vmem>>, vector<16x32xf32>
    %10 = arith.addf %8, %9 : vector<16x32xf32>
    %c0_5 = arith.constant 0 : index
    %c0_6 = arith.constant 0 : index
    %11 = vector.load %arg9[%c0_5, %c0_6] : memref<13x128xf32, #tpu.memory_space<vmem>>, vector<1x32xf32>
    %c1 = arith.constant 1 : index
    %c0_7 = arith.constant 0 : index
    %12 = vector.load %arg9[%c1, %c0_7] : memref<13x128xf32, #tpu.memory_space<vmem>>, vector<1x32xf32>
    %cst_8 = arith.constant dense<0.000000e+00> : vector<16xf32>
    %13 = vector.multi_reduction <add>, %10, %cst_8 [1] : vector<16x32xf32> to vector<16xf32>
    %14 = vector.shape_cast %13 : vector<16xf32> to vector<16x1xf32>
    %cst_9 = arith.constant 3.200000e+01 : f32
    %15 = vector.broadcast %cst_9 : f32 to vector<16x1xf32>
    %16 = arith.divf %14, %15 : vector<16x1xf32>
    %17 = vector.broadcast %16 : vector<16x1xf32> to vector<16x32xf32>
    %18 = arith.subf %10, %17 : vector<16x32xf32>
    %19 = arith.mulf %18, %18 : vector<16x32xf32>
    %cst_10 = arith.constant dense<0.000000e+00> : vector<16xf32>
    %20 = vector.multi_reduction <add>, %19, %cst_10 [1] : vector<16x32xf32> to vector<16xf32>
    %21 = vector.shape_cast %20 : vector<16xf32> to vector<16x1xf32>
    %cst_11 = arith.constant 3.200000e+01 : f32
    %22 = vector.broadcast %cst_11 : f32 to vector<16x1xf32>
    %23 = arith.divf %21, %22 : vector<16x1xf32>
    %24 = vector.broadcast %16 : vector<16x1xf32> to vector<16x32xf32>
    %25 = arith.subf %10, %24 : vector<16x32xf32>
    %cst_12 = arith.constant 9.99999996E-13 : f32
    %26 = vector.broadcast %cst_12 : f32 to vector<16x1xf32>
    %27 = arith.addf %23, %26 : vector<16x1xf32>
    %28 = math.rsqrt %27 : vector<16x1xf32>
    %29 = vector.broadcast %28 : vector<16x1xf32> to vector<16x32xf32>
    %30 = arith.mulf %25, %29 : vector<16x32xf32>
    %31 = vector.broadcast %11 : vector<1x32xf32> to vector<16x32xf32>
    %32 = arith.mulf %30, %31 : vector<16x32xf32>
    %33 = vector.broadcast %12 : vector<1x32xf32> to vector<16x32xf32>
    %34 = arith.addf %32, %33 : vector<16x32xf32>
    %35 = arith.truncf %34 : vector<16x32xf32> to vector<16x32xbf16>
    %c0_13 = arith.constant 0 : index
    %c0_14 = arith.constant 0 : index
    %36 = vector.load %arg4[%c0_13, %c0_14] : memref<32x96xbf16, #tpu.memory_space<vmem>>, vector<32x96xbf16>
    %cst_15 = arith.constant dense<0.000000e+00> : vector<16x96xf32>
    %37 = tpu.matmul %35, %36, %cst_15 {dimension_numbers = #tpu.dot_dimension_numbers<[1], [0], [0], [1], [0, 0, 1, 1], [], []>} : vector<16x32xbf16>, vector<32x96xbf16>, vector<16x96xf32> -> vector<16x96xf32>
    %c2 = arith.constant 2 : index
    %c0_16 = arith.constant 0 : index
    %38 = vector.load %arg9[%c2, %c0_16] : memref<13x128xf32, #tpu.memory_space<vmem>>, vector<1x96xf32>
    %39 = vector.broadcast %38 : vector<1x96xf32> to vector<16x96xf32>
    %40 = arith.addf %37, %39 : vector<16x96xf32>
    %41 = vector.extract_strided_slice %40 {offsets = [0, 0], sizes = [16, 32], strides = [1, 1]} : vector<16x96xf32> to vector<16x32xf32>
    %42 = vector.extract_strided_slice %40 {offsets = [0, 32], sizes = [16, 32], strides = [1, 1]} : vector<16x96xf32> to vector<16x32xf32>
    %43 = vector.extract_strided_slice %40 {offsets = [0, 64], sizes = [16, 32], strides = [1, 1]} : vector<16x96xf32> to vector<16x32xf32>
    %44 = arith.truncf %41 : vector<16x32xf32> to vector<16x32xbf16>
    %45 = arith.truncf %42 : vector<16x32xf32> to vector<16x32xbf16>
    %cst_17 = arith.constant dense<0.000000e+00> : vector<16x16xf32>
    %46 = tpu.matmul %44, %45, %cst_17 {dimension_numbers = #tpu.dot_dimension_numbers<[1], [1], [0], [0], [0, 0, 1, 0], [], []>} : vector<16x32xbf16>, vector<16x32xbf16>, vector<16x16xf32> -> vector<16x16xf32>
    %cst_18 = arith.constant 0.176776692 : f32
    %47 = vector.broadcast %cst_18 : f32 to vector<16x16xf32>
    %48 = arith.mulf %46, %47 : vector<16x16xf32>
    %c0_19 = arith.constant 0 : index
    %c0_20 = arith.constant 0 : index
    %49 = vector.load %arg2[%c0_19, %c0_20] : memref<16x16xf32, #tpu.memory_space<vmem>>, vector<16x16xf32>
    %50 = arith.addf %48, %49 : vector<16x16xf32>
    %cst_21 = arith.constant dense<0xFF800000> : vector<16xf32>
    %51 = vector.multi_reduction <maximumf>, %50, %cst_21 [1] : vector<16x16xf32> to vector<16xf32>
    %52 = vector.shape_cast %51 : vector<16xf32> to vector<16x1xf32>
    %53 = vector.broadcast %52 : vector<16x1xf32> to vector<16x16xf32>
    %54 = arith.subf %50, %53 : vector<16x16xf32>
    %55 = math.exp %54 : vector<16x16xf32>
    %cst_22 = arith.constant dense<0.000000e+00> : vector<16xf32>
    %56 = vector.multi_reduction <add>, %55, %cst_22 [1] : vector<16x16xf32> to vector<16xf32>
    %57 = vector.shape_cast %56 : vector<16xf32> to vector<16x1xf32>
    %58 = tpu.reciprocal %57 {approx = true} : vector<16x1xf32> -> vector<16x1xf32>
    %59 = vector.broadcast %58 : vector<16x1xf32> to vector<16x16xf32>
    %60 = arith.mulf %55, %59 : vector<16x16xf32>
    %61 = arith.truncf %60 : vector<16x16xf32> to vector<16x16xbf16>
    %62 = arith.truncf %43 : vector<16x32xf32> to vector<16x32xbf16>
    %cst_23 = arith.constant dense<0.000000e+00> : vector<16x32xf32>
    %63 = tpu.matmul %61, %62, %cst_23 {dimension_numbers = #tpu.dot_dimension_numbers<[1], [0], [0], [1], [0, 0, 1, 1], [], []>} : vector<16x16xbf16>, vector<16x32xbf16>, vector<16x32xf32> -> vector<16x32xf32>
    %64 = arith.truncf %63 : vector<16x32xf32> to vector<16x32xbf16>
    %c0_24 = arith.constant 0 : index
    %c0_25 = arith.constant 0 : index
    %65 = vector.load %arg5[%c0_24, %c0_25] : memref<32x32xbf16, #tpu.memory_space<vmem>>, vector<32x32xbf16>
    %cst_26 = arith.constant dense<0.000000e+00> : vector<16x32xf32>
    %66 = tpu.matmul %64, %65, %cst_26 {dimension_numbers = #tpu.dot_dimension_numbers<[1], [0], [0], [1], [0, 0, 1, 1], [], []>} : vector<16x32xbf16>, vector<32x32xbf16>, vector<16x32xf32> -> vector<16x32xf32>
    %c3 = arith.constant 3 : index
    %c0_27 = arith.constant 0 : index
    %67 = vector.load %arg9[%c3, %c0_27] : memref<13x128xf32, #tpu.memory_space<vmem>>, vector<1x32xf32>
    %68 = vector.broadcast %67 : vector<1x32xf32> to vector<16x32xf32>
    %69 = arith.addf %66, %68 : vector<16x32xf32>
    %70 = arith.addf %34, %69 : vector<16x32xf32>
    %c4 = arith.constant 4 : index
    %c0_28 = arith.constant 0 : index
    %71 = vector.load %arg9[%c4, %c0_28] : memref<13x128xf32, #tpu.memory_space<vmem>>, vector<1x32xf32>
    %c5 = arith.constant 5 : index
    %c0_29 = arith.constant 0 : index
    %72 = vector.load %arg9[%c5, %c0_29] : memref<13x128xf32, #tpu.memory_space<vmem>>, vector<1x32xf32>
    %cst_30 = arith.constant dense<0.000000e+00> : vector<16xf32>
    %73 = vector.multi_reduction <add>, %70, %cst_30 [1] : vector<16x32xf32> to vector<16xf32>
    %74 = vector.shape_cast %73 : vector<16xf32> to vector<16x1xf32>
    %cst_31 = arith.constant 3.200000e+01 : f32
    %75 = vector.broadcast %cst_31 : f32 to vector<16x1xf32>
    %76 = arith.divf %74, %75 : vector<16x1xf32>
    %77 = vector.broadcast %76 : vector<16x1xf32> to vector<16x32xf32>
    %78 = arith.subf %70, %77 : vector<16x32xf32>
    %79 = arith.mulf %78, %78 : vector<16x32xf32>
    %cst_32 = arith.constant dense<0.000000e+00> : vector<16xf32>
    %80 = vector.multi_reduction <add>, %79, %cst_32 [1] : vector<16x32xf32> to vector<16xf32>
    %81 = vector.shape_cast %80 : vector<16xf32> to vector<16x1xf32>
    %cst_33 = arith.constant 3.200000e+01 : f32
    %82 = vector.broadcast %cst_33 : f32 to vector<16x1xf32>
    %83 = arith.divf %81, %82 : vector<16x1xf32>
    %84 = vector.broadcast %76 : vector<16x1xf32> to vector<16x32xf32>
    %85 = arith.subf %70, %84 : vector<16x32xf32>
    %cst_34 = arith.constant 9.99999996E-13 : f32
    %86 = vector.broadcast %cst_34 : f32 to vector<16x1xf32>
    %87 = arith.addf %83, %86 : vector<16x1xf32>
    %88 = math.rsqrt %87 : vector<16x1xf32>
    %89 = vector.broadcast %88 : vector<16x1xf32> to vector<16x32xf32>
    %90 = arith.mulf %85, %89 : vector<16x32xf32>
    %91 = vector.broadcast %71 : vector<1x32xf32> to vector<16x32xf32>
    %92 = arith.mulf %90, %91 : vector<16x32xf32>
    %93 = vector.broadcast %72 : vector<1x32xf32> to vector<16x32xf32>
    %94 = arith.addf %92, %93 : vector<16x32xf32>
    %95 = arith.truncf %94 : vector<16x32xf32> to vector<16x32xbf16>
    %c0_35 = arith.constant 0 : index
    %c0_36 = arith.constant 0 : index
    %96 = vector.load %arg6[%c0_35, %c0_36] : memref<32x128xbf16, #tpu.memory_space<vmem>>, vector<32x128xbf16>
    %cst_37 = arith.constant dense<0.000000e+00> : vector<16x128xf32>
    %97 = tpu.matmul %95, %96, %cst_37 {dimension_numbers = #tpu.dot_dimension_numbers<[1], [0], [0], [1], [0, 0, 1, 1], [], []>} : vector<16x32xbf16>, vector<32x128xbf16>, vector<16x128xf32> -> vector<16x128xf32>
    %c6 = arith.constant 6 : index
    %c0_38 = arith.constant 0 : index
    %98 = vector.load %arg9[%c6, %c0_38] : memref<13x128xf32, #tpu.memory_space<vmem>>, vector<1x128xf32>
    %99 = vector.broadcast %98 : vector<1x128xf32> to vector<16x128xf32>
    %100 = arith.addf %97, %99 : vector<16x128xf32>
    %cst_39 = arith.constant 5.000000e-01 : f32
    %101 = vector.broadcast %cst_39 : f32 to vector<16x128xf32>
    %102 = arith.mulf %101, %100 : vector<16x128xf32>
    %cst_40 = arith.constant 4.471500e-02 : f32
    %103 = vector.broadcast %cst_40 : f32 to vector<16x128xf32>
    %104 = arith.mulf %103, %100 : vector<16x128xf32>
    %105 = arith.mulf %104, %100 : vector<16x128xf32>
    %106 = arith.mulf %105, %100 : vector<16x128xf32>
    %107 = arith.addf %100, %106 : vector<16x128xf32>
    %cst_41 = arith.constant 0.797884583 : f32
    %108 = vector.broadcast %cst_41 : f32 to vector<16x128xf32>
    %109 = arith.mulf %108, %107 : vector<16x128xf32>
    %110 = math.tanh %109 : vector<16x128xf32>
    %cst_42 = arith.constant 1.000000e+00 : f32
    %111 = vector.broadcast %cst_42 : f32 to vector<16x128xf32>
    %112 = arith.addf %111, %110 : vector<16x128xf32>
    %113 = arith.mulf %102, %112 : vector<16x128xf32>
    %114 = arith.truncf %113 : vector<16x128xf32> to vector<16x128xbf16>
    %c0_43 = arith.constant 0 : index
    %c0_44 = arith.constant 0 : index
    %115 = vector.load %arg7[%c0_43, %c0_44] : memref<128x32xbf16, #tpu.memory_space<vmem>>, vector<128x32xbf16>
    %cst_45 = arith.constant dense<0.000000e+00> : vector<16x32xf32>
    %116 = tpu.matmul %114, %115, %cst_45 {dimension_numbers = #tpu.dot_dimension_numbers<[1], [0], [0], [1], [0, 0, 1, 1], [], []>} : vector<16x128xbf16>, vector<128x32xbf16>, vector<16x32xf32> -> vector<16x32xf32>
    %c7 = arith.constant 7 : index
    %c0_46 = arith.constant 0 : index
    %117 = vector.load %arg9[%c7, %c0_46] : memref<13x128xf32, #tpu.memory_space<vmem>>, vector<1x32xf32>
    %118 = vector.broadcast %117 : vector<1x32xf32> to vector<16x32xf32>
    %119 = arith.addf %116, %118 : vector<16x32xf32>
    %120 = arith.addf %94, %119 : vector<16x32xf32>
    %c8 = arith.constant 8 : index
    %c0_47 = arith.constant 0 : index
    %121 = vector.load %arg9[%c8, %c0_47] : memref<13x128xf32, #tpu.memory_space<vmem>>, vector<1x32xf32>
    %c9 = arith.constant 9 : index
    %c0_48 = arith.constant 0 : index
    %122 = vector.load %arg9[%c9, %c0_48] : memref<13x128xf32, #tpu.memory_space<vmem>>, vector<1x32xf32>
    %cst_49 = arith.constant dense<0.000000e+00> : vector<16xf32>
    %123 = vector.multi_reduction <add>, %120, %cst_49 [1] : vector<16x32xf32> to vector<16xf32>
    %124 = vector.shape_cast %123 : vector<16xf32> to vector<16x1xf32>
    %cst_50 = arith.constant 3.200000e+01 : f32
    %125 = vector.broadcast %cst_50 : f32 to vector<16x1xf32>
    %126 = arith.divf %124, %125 : vector<16x1xf32>
    %127 = vector.broadcast %126 : vector<16x1xf32> to vector<16x32xf32>
    %128 = arith.subf %120, %127 : vector<16x32xf32>
    %129 = arith.mulf %128, %128 : vector<16x32xf32>
    %cst_51 = arith.constant dense<0.000000e+00> : vector<16xf32>
    %130 = vector.multi_reduction <add>, %129, %cst_51 [1] : vector<16x32xf32> to vector<16xf32>
    %131 = vector.shape_cast %130 : vector<16xf32> to vector<16x1xf32>
    %cst_52 = arith.constant 3.200000e+01 : f32
    %132 = vector.broadcast %cst_52 : f32 to vector<16x1xf32>
    %133 = arith.divf %131, %132 : vector<16x1xf32>
    %134 = vector.broadcast %126 : vector<16x1xf32> to vector<16x32xf32>
    %135 = arith.subf %120, %134 : vector<16x32xf32>
    %cst_53 = arith.constant 9.99999996E-13 : f32
    %136 = vector.broadcast %cst_53 : f32 to vector<16x1xf32>
    %137 = arith.addf %133, %136 : vector<16x1xf32>
    %138 = math.rsqrt %137 : vector<16x1xf32>
    %139 = vector.broadcast %138 : vector<16x1xf32> to vector<16x32xf32>
    %140 = arith.mulf %135, %139 : vector<16x32xf32>
    %141 = vector.broadcast %121 : vector<1x32xf32> to vector<16x32xf32>
    %142 = arith.mulf %140, %141 : vector<16x32xf32>
    %143 = vector.broadcast %122 : vector<1x32xf32> to vector<16x32xf32>
    %144 = arith.addf %142, %143 : vector<16x32xf32>
    %145 = arith.truncf %144 : vector<16x32xf32> to vector<16x32xbf16>
    %c0_54 = arith.constant 0 : index
    %c0_55 = arith.constant 0 : index
    %146 = vector.load %arg8[%c0_54, %c0_55] : memref<32x32xbf16, #tpu.memory_space<vmem>>, vector<32x32xbf16>
    %cst_56 = arith.constant dense<0.000000e+00> : vector<16x32xf32>
    %147 = tpu.matmul %145, %146, %cst_56 {dimension_numbers = #tpu.dot_dimension_numbers<[1], [0], [0], [1], [0, 0, 1, 1], [], []>} : vector<16x32xbf16>, vector<32x32xbf16>, vector<16x32xf32> -> vector<16x32xf32>
    %c10 = arith.constant 10 : index
    %c0_57 = arith.constant 0 : index
    %148 = vector.load %arg9[%c10, %c0_57] : memref<13x128xf32, #tpu.memory_space<vmem>>, vector<1x32xf32>
    %149 = vector.broadcast %148 : vector<1x32xf32> to vector<16x32xf32>
    %150 = arith.addf %147, %149 : vector<16x32xf32>
    %cst_58 = arith.constant 5.000000e-01 : f32
    %151 = vector.broadcast %cst_58 : f32 to vector<16x32xf32>
    %152 = arith.mulf %151, %150 : vector<16x32xf32>
    %cst_59 = arith.constant 4.471500e-02 : f32
    %153 = vector.broadcast %cst_59 : f32 to vector<16x32xf32>
    %154 = arith.mulf %153, %150 : vector<16x32xf32>
    %155 = arith.mulf %154, %150 : vector<16x32xf32>
    %156 = arith.mulf %155, %150 : vector<16x32xf32>
    %157 = arith.addf %150, %156 : vector<16x32xf32>
    %cst_60 = arith.constant 0.797884583 : f32
    %158 = vector.broadcast %cst_60 : f32 to vector<16x32xf32>
    %159 = arith.mulf %158, %157 : vector<16x32xf32>
    %160 = math.tanh %159 : vector<16x32xf32>
    %cst_61 = arith.constant 1.000000e+00 : f32
    %161 = vector.broadcast %cst_61 : f32 to vector<16x32xf32>
    %162 = arith.addf %161, %160 : vector<16x32xf32>
    %163 = arith.mulf %152, %162 : vector<16x32xf32>
    %c11 = arith.constant 11 : index
    %c0_62 = arith.constant 0 : index
    %164 = vector.load %arg9[%c11, %c0_62] : memref<13x128xf32, #tpu.memory_space<vmem>>, vector<1x32xf32>
    %c12 = arith.constant 12 : index
    %c0_63 = arith.constant 0 : index
    %165 = vector.load %arg9[%c12, %c0_63] : memref<13x128xf32, #tpu.memory_space<vmem>>, vector<1x1xf32>
    %166 = vector.broadcast %164 : vector<1x32xf32> to vector<16x32xf32>
    %167 = arith.mulf %163, %166 : vector<16x32xf32>
    %cst_64 = arith.constant dense<0.000000e+00> : vector<16xf32>
    %168 = vector.multi_reduction <add>, %167, %cst_64 [1] : vector<16x32xf32> to vector<16xf32>
    %169 = vector.shape_cast %168 : vector<16xf32> to vector<16x1xf32>
    %170 = vector.broadcast %165 : vector<1x1xf32> to vector<16x1xf32>
    %171 = arith.addf %169, %170 : vector<16x1xf32>
    %c0_65 = arith.constant 0 : index
    %c0_66 = arith.constant 0 : index
    %172 = vector.load %arg10[%c0_65, %c0_66] : memref<16x1xf32, #tpu.memory_space<vmem>>, vector<16x1xf32>
    tpu.vector_store %arg10[%c0_65, %c0_66], %171 {strides = array<i32>} : memref<16x1xf32, #tpu.memory_space<vmem>>, vector<16x1xf32>,
    return
  }
}

module attributes {stable_mosaic.version = 11 : i64} {
  func.func @generator_kernel(%arg0: memref<16x1xi32, #tpu.memory_space<vmem>>, %arg1: memref<16x32xf32, #tpu.memory_space<vmem>>, %arg2: memref<16x16xf32, #tpu.memory_space<vmem>>, %arg3: memref<6x16xbf16, #tpu.memory_space<vmem>>, %arg4: memref<6x128xf32, #tpu.memory_space<vmem>>, %arg5: memref<128x32xbf16, #tpu.memory_space<vmem>>, %arg6: memref<32x96xbf16, #tpu.memory_space<vmem>>, %arg7: memref<32x32xbf16, #tpu.memory_space<vmem>>, %arg8: memref<32x128xbf16, #tpu.memory_space<vmem>>, %arg9: memref<128x32xbf16, #tpu.memory_space<vmem>>, %arg10: memref<32x32xbf16, #tpu.memory_space<vmem>>, %arg11: memref<32x128xbf16, #tpu.memory_space<vmem>>, %arg12: memref<14x128xf32, #tpu.memory_space<vmem>>, %arg13: memref<6x128xf32, #tpu.memory_space<vmem>>, %arg14: memref<6x1xi32, #tpu.memory_space<vmem>>) attributes {dimension_semantics = [], scalar_prefetch = 0 : i64, scratch_operands = 0 : i64, tpu.core_type = #tpu.core_type<tc>} {
    %c0 = arith.constant 0 : index
    %c0_0 = arith.constant 0 : index
    %0 = vector.load %arg0[%c0, %c0_0] : memref<16x1xi32, #tpu.memory_space<vmem>>, vector<16x1xi32>
    %1 = tpu.iota {dimensions = array<i32: 1>} : vector<16x128xi32>
    %2 = vector.broadcast %0 : vector<16x1xi32> to vector<16x128xi32>
    %3 = arith.cmpi eq, %1, %2 : vector<16x128xi32>
    %4 = arith.extui %3 : vector<16x128xi1> to vector<16x128xi32>
    %5 = arith.sitofp %4 : vector<16x128xi32> to vector<16x128xf32>
    %6 = arith.truncf %5 : vector<16x128xf32> to vector<16x128xbf16>
    %c0_1 = arith.constant 0 : index
    %c0_2 = arith.constant 0 : index
    %7 = vector.load %arg5[%c0_1, %c0_2] : memref<128x32xbf16, #tpu.memory_space<vmem>>, vector<128x32xbf16>
    %cst = arith.constant dense<0.000000e+00> : vector<16x32xf32>
    %8 = tpu.matmul %6, %7, %cst {dimension_numbers = #tpu.dot_dimension_numbers<[1], [0], [0], [1], [0, 0, 1, 1], [], []>} : vector<16x128xbf16>, vector<128x32xbf16>, vector<16x32xf32> -> vector<16x32xf32>
    %c0_3 = arith.constant 0 : index
    %c0_4 = arith.constant 0 : index
    %9 = vector.load %arg1[%c0_3, %c0_4] : memref<16x32xf32, #tpu.memory_space<vmem>>, vector<16x32xf32>
    %10 = arith.addf %8, %9 : vector<16x32xf32>
    %c0_5 = arith.constant 0 : index
    %c0_6 = arith.constant 0 : index
    %11 = vector.load %arg12[%c0_5, %c0_6] : memref<14x128xf32, #tpu.memory_space<vmem>>, vector<1x32xf32>
    %c1 = arith.constant 1 : index
    %c0_7 = arith.constant 0 : index
    %12 = vector.load %arg12[%c1, %c0_7] : memref<14x128xf32, #tpu.memory_space<vmem>>, vector<1x32xf32>
    %cst_8 = arith.constant dense<0.000000e+00> : vector<16xf32>
    %13 = vector.multi_reduction <add>, %10, %cst_8 [1] : vector<16x32xf32> to vector<16xf32>
    %14 = vector.shape_cast %13 : vector<16xf32> to vector<16x1xf32>
    %cst_9 = arith.constant 3.200000e+01 : f32
    %15 = vector.broadcast %cst_9 : f32 to vector<16x1xf32>
    %16 = arith.divf %14, %15 : vector<16x1xf32>
    %17 = vector.broadcast %16 : vector<16x1xf32> to vector<16x32xf32>
    %18 = arith.subf %10, %17 : vector<16x32xf32>
    %19 = arith.mulf %18, %18 : vector<16x32xf32>
    %cst_10 = arith.constant dense<0.000000e+00> : vector<16xf32>
    %20 = vector.multi_reduction <add>, %19, %cst_10 [1] : vector<16x32xf32> to vector<16xf32>
    %21 = vector.shape_cast %20 : vector<16xf32> to vector<16x1xf32>
    %cst_11 = arith.constant 3.200000e+01 : f32
    %22 = vector.broadcast %cst_11 : f32 to vector<16x1xf32>
    %23 = arith.divf %21, %22 : vector<16x1xf32>
    %24 = vector.broadcast %16 : vector<16x1xf32> to vector<16x32xf32>
    %25 = arith.subf %10, %24 : vector<16x32xf32>
    %cst_12 = arith.constant 9.99999996E-13 : f32
    %26 = vector.broadcast %cst_12 : f32 to vector<16x1xf32>
    %27 = arith.addf %23, %26 : vector<16x1xf32>
    %28 = math.rsqrt %27 : vector<16x1xf32>
    %29 = vector.broadcast %28 : vector<16x1xf32> to vector<16x32xf32>
    %30 = arith.mulf %25, %29 : vector<16x32xf32>
    %31 = vector.broadcast %11 : vector<1x32xf32> to vector<16x32xf32>
    %32 = arith.mulf %30, %31 : vector<16x32xf32>
    %33 = vector.broadcast %12 : vector<1x32xf32> to vector<16x32xf32>
    %34 = arith.addf %32, %33 : vector<16x32xf32>
    %35 = arith.truncf %34 : vector<16x32xf32> to vector<16x32xbf16>
    %c0_13 = arith.constant 0 : index
    %c0_14 = arith.constant 0 : index
    %36 = vector.load %arg6[%c0_13, %c0_14] : memref<32x96xbf16, #tpu.memory_space<vmem>>, vector<32x96xbf16>
    %cst_15 = arith.constant dense<0.000000e+00> : vector<16x96xf32>
    %37 = tpu.matmul %35, %36, %cst_15 {dimension_numbers = #tpu.dot_dimension_numbers<[1], [0], [0], [1], [0, 0, 1, 1], [], []>} : vector<16x32xbf16>, vector<32x96xbf16>, vector<16x96xf32> -> vector<16x96xf32>
    %c2 = arith.constant 2 : index
    %c0_16 = arith.constant 0 : index
    %38 = vector.load %arg12[%c2, %c0_16] : memref<14x128xf32, #tpu.memory_space<vmem>>, vector<1x96xf32>
    %39 = vector.broadcast %38 : vector<1x96xf32> to vector<16x96xf32>
    %40 = arith.addf %37, %39 : vector<16x96xf32>
    %41 = vector.extract_strided_slice %40 {offsets = [0, 0], sizes = [16, 32], strides = [1, 1]} : vector<16x96xf32> to vector<16x32xf32>
    %42 = vector.extract_strided_slice %40 {offsets = [0, 32], sizes = [16, 32], strides = [1, 1]} : vector<16x96xf32> to vector<16x32xf32>
    %43 = vector.extract_strided_slice %40 {offsets = [0, 64], sizes = [16, 32], strides = [1, 1]} : vector<16x96xf32> to vector<16x32xf32>
    %44 = arith.truncf %41 : vector<16x32xf32> to vector<16x32xbf16>
    %45 = arith.truncf %42 : vector<16x32xf32> to vector<16x32xbf16>
    %cst_17 = arith.constant dense<0.000000e+00> : vector<16x16xf32>
    %46 = tpu.matmul %44, %45, %cst_17 {dimension_numbers = #tpu.dot_dimension_numbers<[1], [1], [0], [0], [0, 0, 1, 0], [], []>} : vector<16x32xbf16>, vector<16x32xbf16>, vector<16x16xf32> -> vector<16x16xf32>
    %cst_18 = arith.constant 0.176776692 : f32
    %47 = vector.broadcast %cst_18 : f32 to vector<16x16xf32>
    %48 = arith.mulf %46, %47 : vector<16x16xf32>
    %c0_19 = arith.constant 0 : index
    %c0_20 = arith.constant 0 : index
    %49 = vector.load %arg2[%c0_19, %c0_20] : memref<16x16xf32, #tpu.memory_space<vmem>>, vector<16x16xf32>
    %50 = arith.addf %48, %49 : vector<16x16xf32>
    %cst_21 = arith.constant dense<0xFF800000> : vector<16xf32>
    %51 = vector.multi_reduction <maximumf>, %50, %cst_21 [1] : vector<16x16xf32> to vector<16xf32>
    %52 = vector.shape_cast %51 : vector<16xf32> to vector<16x1xf32>
    %53 = vector.broadcast %52 : vector<16x1xf32> to vector<16x16xf32>
    %54 = arith.subf %50, %53 : vector<16x16xf32>
    %55 = math.exp %54 : vector<16x16xf32>
    %cst_22 = arith.constant dense<0.000000e+00> : vector<16xf32>
    %56 = vector.multi_reduction <add>, %55, %cst_22 [1] : vector<16x16xf32> to vector<16xf32>
    %57 = vector.shape_cast %56 : vector<16xf32> to vector<16x1xf32>
    %58 = tpu.reciprocal %57 {approx = true} : vector<16x1xf32> -> vector<16x1xf32>
    %59 = vector.broadcast %58 : vector<16x1xf32> to vector<16x16xf32>
    %60 = arith.mulf %55, %59 : vector<16x16xf32>
    %61 = arith.truncf %60 : vector<16x16xf32> to vector<16x16xbf16>
    %62 = arith.truncf %43 : vector<16x32xf32> to vector<16x32xbf16>
    %cst_23 = arith.constant dense<0.000000e+00> : vector<16x32xf32>
    %63 = tpu.matmul %61, %62, %cst_23 {dimension_numbers = #tpu.dot_dimension_numbers<[1], [0], [0], [1], [0, 0, 1, 1], [], []>} : vector<16x16xbf16>, vector<16x32xbf16>, vector<16x32xf32> -> vector<16x32xf32>
    %64 = arith.truncf %63 : vector<16x32xf32> to vector<16x32xbf16>
    %c0_24 = arith.constant 0 : index
    %c0_25 = arith.constant 0 : index
    %65 = vector.load %arg7[%c0_24, %c0_25] : memref<32x32xbf16, #tpu.memory_space<vmem>>, vector<32x32xbf16>
    %cst_26 = arith.constant dense<0.000000e+00> : vector<16x32xf32>
    %66 = tpu.matmul %64, %65, %cst_26 {dimension_numbers = #tpu.dot_dimension_numbers<[1], [0], [0], [1], [0, 0, 1, 1], [], []>} : vector<16x32xbf16>, vector<32x32xbf16>, vector<16x32xf32> -> vector<16x32xf32>
    %c3 = arith.constant 3 : index
    %c0_27 = arith.constant 0 : index
    %67 = vector.load %arg12[%c3, %c0_27] : memref<14x128xf32, #tpu.memory_space<vmem>>, vector<1x32xf32>
    %68 = vector.broadcast %67 : vector<1x32xf32> to vector<16x32xf32>
    %69 = arith.addf %66, %68 : vector<16x32xf32>
    %70 = arith.addf %34, %69 : vector<16x32xf32>
    %c4 = arith.constant 4 : index
    %c0_28 = arith.constant 0 : index
    %71 = vector.load %arg12[%c4, %c0_28] : memref<14x128xf32, #tpu.memory_space<vmem>>, vector<1x32xf32>
    %c5 = arith.constant 5 : index
    %c0_29 = arith.constant 0 : index
    %72 = vector.load %arg12[%c5, %c0_29] : memref<14x128xf32, #tpu.memory_space<vmem>>, vector<1x32xf32>
    %cst_30 = arith.constant dense<0.000000e+00> : vector<16xf32>
    %73 = vector.multi_reduction <add>, %70, %cst_30 [1] : vector<16x32xf32> to vector<16xf32>
    %74 = vector.shape_cast %73 : vector<16xf32> to vector<16x1xf32>
    %cst_31 = arith.constant 3.200000e+01 : f32
    %75 = vector.broadcast %cst_31 : f32 to vector<16x1xf32>
    %76 = arith.divf %74, %75 : vector<16x1xf32>
    %77 = vector.broadcast %76 : vector<16x1xf32> to vector<16x32xf32>
    %78 = arith.subf %70, %77 : vector<16x32xf32>
    %79 = arith.mulf %78, %78 : vector<16x32xf32>
    %cst_32 = arith.constant dense<0.000000e+00> : vector<16xf32>
    %80 = vector.multi_reduction <add>, %79, %cst_32 [1] : vector<16x32xf32> to vector<16xf32>
    %81 = vector.shape_cast %80 : vector<16xf32> to vector<16x1xf32>
    %cst_33 = arith.constant 3.200000e+01 : f32
    %82 = vector.broadcast %cst_33 : f32 to vector<16x1xf32>
    %83 = arith.divf %81, %82 : vector<16x1xf32>
    %84 = vector.broadcast %76 : vector<16x1xf32> to vector<16x32xf32>
    %85 = arith.subf %70, %84 : vector<16x32xf32>
    %cst_34 = arith.constant 9.99999996E-13 : f32
    %86 = vector.broadcast %cst_34 : f32 to vector<16x1xf32>
    %87 = arith.addf %83, %86 : vector<16x1xf32>
    %88 = math.rsqrt %87 : vector<16x1xf32>
    %89 = vector.broadcast %88 : vector<16x1xf32> to vector<16x32xf32>
    %90 = arith.mulf %85, %89 : vector<16x32xf32>
    %91 = vector.broadcast %71 : vector<1x32xf32> to vector<16x32xf32>
    %92 = arith.mulf %90, %91 : vector<16x32xf32>
    %93 = vector.broadcast %72 : vector<1x32xf32> to vector<16x32xf32>
    %94 = arith.addf %92, %93 : vector<16x32xf32>
    %95 = arith.truncf %94 : vector<16x32xf32> to vector<16x32xbf16>
    %c0_35 = arith.constant 0 : index
    %c0_36 = arith.constant 0 : index
    %96 = vector.load %arg8[%c0_35, %c0_36] : memref<32x128xbf16, #tpu.memory_space<vmem>>, vector<32x128xbf16>
    %cst_37 = arith.constant dense<0.000000e+00> : vector<16x128xf32>
    %97 = tpu.matmul %95, %96, %cst_37 {dimension_numbers = #tpu.dot_dimension_numbers<[1], [0], [0], [1], [0, 0, 1, 1], [], []>} : vector<16x32xbf16>, vector<32x128xbf16>, vector<16x128xf32> -> vector<16x128xf32>
    %c6 = arith.constant 6 : index
    %c0_38 = arith.constant 0 : index
    %98 = vector.load %arg12[%c6, %c0_38] : memref<14x128xf32, #tpu.memory_space<vmem>>, vector<1x128xf32>
    %99 = vector.broadcast %98 : vector<1x128xf32> to vector<16x128xf32>
    %100 = arith.addf %97, %99 : vector<16x128xf32>
    %cst_39 = arith.constant 5.000000e-01 : f32
    %101 = vector.broadcast %cst_39 : f32 to vector<16x128xf32>
    %102 = arith.mulf %101, %100 : vector<16x128xf32>
    %cst_40 = arith.constant 4.471500e-02 : f32
    %103 = vector.broadcast %cst_40 : f32 to vector<16x128xf32>
    %104 = arith.mulf %103, %100 : vector<16x128xf32>
    %105 = arith.mulf %104, %100 : vector<16x128xf32>
    %106 = arith.mulf %105, %100 : vector<16x128xf32>
    %107 = arith.addf %100, %106 : vector<16x128xf32>
    %cst_41 = arith.constant 0.797884583 : f32
    %108 = vector.broadcast %cst_41 : f32 to vector<16x128xf32>
    %109 = arith.mulf %108, %107 : vector<16x128xf32>
    %110 = math.tanh %109 : vector<16x128xf32>
    %cst_42 = arith.constant 1.000000e+00 : f32
    %111 = vector.broadcast %cst_42 : f32 to vector<16x128xf32>
    %112 = arith.addf %111, %110 : vector<16x128xf32>
    %113 = arith.mulf %102, %112 : vector<16x128xf32>
    %114 = arith.truncf %113 : vector<16x128xf32> to vector<16x128xbf16>
    %c0_43 = arith.constant 0 : index
    %c0_44 = arith.constant 0 : index
    %115 = vector.load %arg9[%c0_43, %c0_44] : memref<128x32xbf16, #tpu.memory_space<vmem>>, vector<128x32xbf16>
    %cst_45 = arith.constant dense<0.000000e+00> : vector<16x32xf32>
    %116 = tpu.matmul %114, %115, %cst_45 {dimension_numbers = #tpu.dot_dimension_numbers<[1], [0], [0], [1], [0, 0, 1, 1], [], []>} : vector<16x128xbf16>, vector<128x32xbf16>, vector<16x32xf32> -> vector<16x32xf32>
    %c7 = arith.constant 7 : index
    %c0_46 = arith.constant 0 : index
    %117 = vector.load %arg12[%c7, %c0_46] : memref<14x128xf32, #tpu.memory_space<vmem>>, vector<1x32xf32>
    %118 = vector.broadcast %117 : vector<1x32xf32> to vector<16x32xf32>
    %119 = arith.addf %116, %118 : vector<16x32xf32>
    %120 = arith.addf %94, %119 : vector<16x32xf32>
    %c8 = arith.constant 8 : index
    %c0_47 = arith.constant 0 : index
    %121 = vector.load %arg12[%c8, %c0_47] : memref<14x128xf32, #tpu.memory_space<vmem>>, vector<1x32xf32>
    %c9 = arith.constant 9 : index
    %c0_48 = arith.constant 0 : index
    %122 = vector.load %arg12[%c9, %c0_48] : memref<14x128xf32, #tpu.memory_space<vmem>>, vector<1x32xf32>
    %cst_49 = arith.constant dense<0.000000e+00> : vector<16xf32>
    %123 = vector.multi_reduction <add>, %120, %cst_49 [1] : vector<16x32xf32> to vector<16xf32>
    %124 = vector.shape_cast %123 : vector<16xf32> to vector<16x1xf32>
    %cst_50 = arith.constant 3.200000e+01 : f32
    %125 = vector.broadcast %cst_50 : f32 to vector<16x1xf32>
    %126 = arith.divf %124, %125 : vector<16x1xf32>
    %127 = vector.broadcast %126 : vector<16x1xf32> to vector<16x32xf32>
    %128 = arith.subf %120, %127 : vector<16x32xf32>
    %129 = arith.mulf %128, %128 : vector<16x32xf32>
    %cst_51 = arith.constant dense<0.000000e+00> : vector<16xf32>
    %130 = vector.multi_reduction <add>, %129, %cst_51 [1] : vector<16x32xf32> to vector<16xf32>
    %131 = vector.shape_cast %130 : vector<16xf32> to vector<16x1xf32>
    %cst_52 = arith.constant 3.200000e+01 : f32
    %132 = vector.broadcast %cst_52 : f32 to vector<16x1xf32>
    %133 = arith.divf %131, %132 : vector<16x1xf32>
    %134 = vector.broadcast %126 : vector<16x1xf32> to vector<16x32xf32>
    %135 = arith.subf %120, %134 : vector<16x32xf32>
    %cst_53 = arith.constant 9.99999996E-13 : f32
    %136 = vector.broadcast %cst_53 : f32 to vector<16x1xf32>
    %137 = arith.addf %133, %136 : vector<16x1xf32>
    %138 = math.rsqrt %137 : vector<16x1xf32>
    %139 = vector.broadcast %138 : vector<16x1xf32> to vector<16x32xf32>
    %140 = arith.mulf %135, %139 : vector<16x32xf32>
    %141 = vector.broadcast %121 : vector<1x32xf32> to vector<16x32xf32>
    %142 = arith.mulf %140, %141 : vector<16x32xf32>
    %143 = vector.broadcast %122 : vector<1x32xf32> to vector<16x32xf32>
    %144 = arith.addf %142, %143 : vector<16x32xf32>
    %c0_54 = arith.constant 0 : index
    %c0_55 = arith.constant 0 : index
    %145 = vector.load %arg3[%c0_54, %c0_55] : memref<6x16xbf16, #tpu.memory_space<vmem>>, vector<6x16xbf16>
    %146 = arith.truncf %144 : vector<16x32xf32> to vector<16x32xbf16>
    %cst_56 = arith.constant dense<0.000000e+00> : vector<6x32xf32>
    %147 = tpu.matmul %145, %146, %cst_56 {dimension_numbers = #tpu.dot_dimension_numbers<[1], [0], [0], [1], [0, 0, 1, 1], [], []>} : vector<6x16xbf16>, vector<16x32xbf16>, vector<6x32xf32> -> vector<6x32xf32>
    %148 = arith.truncf %147 : vector<6x32xf32> to vector<6x32xbf16>
    %c0_57 = arith.constant 0 : index
    %c0_58 = arith.constant 0 : index
    %149 = vector.load %arg10[%c0_57, %c0_58] : memref<32x32xbf16, #tpu.memory_space<vmem>>, vector<32x32xbf16>
    %cst_59 = arith.constant dense<0.000000e+00> : vector<6x32xf32>
    %150 = tpu.matmul %148, %149, %cst_59 {dimension_numbers = #tpu.dot_dimension_numbers<[1], [0], [0], [1], [0, 0, 1, 1], [], []>} : vector<6x32xbf16>, vector<32x32xbf16>, vector<6x32xf32> -> vector<6x32xf32>
    %c10 = arith.constant 10 : index
    %c0_60 = arith.constant 0 : index
    %151 = vector.load %arg12[%c10, %c0_60] : memref<14x128xf32, #tpu.memory_space<vmem>>, vector<1x32xf32>
    %152 = vector.broadcast %151 : vector<1x32xf32> to vector<6x32xf32>
    %153 = arith.addf %150, %152 : vector<6x32xf32>
    %cst_61 = arith.constant 5.000000e-01 : f32
    %154 = vector.broadcast %cst_61 : f32 to vector<6x32xf32>
    %155 = arith.mulf %154, %153 : vector<6x32xf32>
    %cst_62 = arith.constant 4.471500e-02 : f32
    %156 = vector.broadcast %cst_62 : f32 to vector<6x32xf32>
    %157 = arith.mulf %156, %153 : vector<6x32xf32>
    %158 = arith.mulf %157, %153 : vector<6x32xf32>
    %159 = arith.mulf %158, %153 : vector<6x32xf32>
    %160 = arith.addf %153, %159 : vector<6x32xf32>
    %cst_63 = arith.constant 0.797884583 : f32
    %161 = vector.broadcast %cst_63 : f32 to vector<6x32xf32>
    %162 = arith.mulf %161, %160 : vector<6x32xf32>
    %163 = math.tanh %162 : vector<6x32xf32>
    %cst_64 = arith.constant 1.000000e+00 : f32
    %164 = vector.broadcast %cst_64 : f32 to vector<6x32xf32>
    %165 = arith.addf %164, %163 : vector<6x32xf32>
    %166 = arith.mulf %155, %165 : vector<6x32xf32>
    %c11 = arith.constant 11 : index
    %c0_65 = arith.constant 0 : index
    %167 = vector.load %arg12[%c11, %c0_65] : memref<14x128xf32, #tpu.memory_space<vmem>>, vector<1x32xf32>
    %c12 = arith.constant 12 : index
    %c0_66 = arith.constant 0 : index
    %168 = vector.load %arg12[%c12, %c0_66] : memref<14x128xf32, #tpu.memory_space<vmem>>, vector<1x32xf32>
    %cst_67 = arith.constant dense<0.000000e+00> : vector<6xf32>
    %169 = vector.multi_reduction <add>, %166, %cst_67 [1] : vector<6x32xf32> to vector<6xf32>
    %170 = vector.shape_cast %169 : vector<6xf32> to vector<6x1xf32>
    %cst_68 = arith.constant 3.200000e+01 : f32
    %171 = vector.broadcast %cst_68 : f32 to vector<6x1xf32>
    %172 = arith.divf %170, %171 : vector<6x1xf32>
    %173 = vector.broadcast %172 : vector<6x1xf32> to vector<6x32xf32>
    %174 = arith.subf %166, %173 : vector<6x32xf32>
    %175 = arith.mulf %174, %174 : vector<6x32xf32>
    %cst_69 = arith.constant dense<0.000000e+00> : vector<6xf32>
    %176 = vector.multi_reduction <add>, %175, %cst_69 [1] : vector<6x32xf32> to vector<6xf32>
    %177 = vector.shape_cast %176 : vector<6xf32> to vector<6x1xf32>
    %cst_70 = arith.constant 3.200000e+01 : f32
    %178 = vector.broadcast %cst_70 : f32 to vector<6x1xf32>
    %179 = arith.divf %177, %178 : vector<6x1xf32>
    %180 = vector.broadcast %172 : vector<6x1xf32> to vector<6x32xf32>
    %181 = arith.subf %166, %180 : vector<6x32xf32>
    %cst_71 = arith.constant 9.99999996E-13 : f32
    %182 = vector.broadcast %cst_71 : f32 to vector<6x1xf32>
    %183 = arith.addf %179, %182 : vector<6x1xf32>
    %184 = math.rsqrt %183 : vector<6x1xf32>
    %185 = vector.broadcast %184 : vector<6x1xf32> to vector<6x32xf32>
    %186 = arith.mulf %181, %185 : vector<6x32xf32>
    %187 = vector.broadcast %167 : vector<1x32xf32> to vector<6x32xf32>
    %188 = arith.mulf %186, %187 : vector<6x32xf32>
    %189 = vector.broadcast %168 : vector<1x32xf32> to vector<6x32xf32>
    %190 = arith.addf %188, %189 : vector<6x32xf32>
    %191 = arith.truncf %190 : vector<6x32xf32> to vector<6x32xbf16>
    %c0_72 = arith.constant 0 : index
    %c0_73 = arith.constant 0 : index
    %192 = vector.load %arg11[%c0_72, %c0_73] : memref<32x128xbf16, #tpu.memory_space<vmem>>, vector<32x128xbf16>
    %cst_74 = arith.constant dense<0.000000e+00> : vector<6x128xf32>
    %193 = tpu.matmul %191, %192, %cst_74 {dimension_numbers = #tpu.dot_dimension_numbers<[1], [0], [0], [1], [0, 0, 1, 1], [], []>} : vector<6x32xbf16>, vector<32x128xbf16>, vector<6x128xf32> -> vector<6x128xf32>
    %c13 = arith.constant 13 : index
    %c0_75 = arith.constant 0 : index
    %194 = vector.load %arg12[%c13, %c0_75] : memref<14x128xf32, #tpu.memory_space<vmem>>, vector<1x128xf32>
    %195 = vector.broadcast %194 : vector<1x128xf32> to vector<6x128xf32>
    %196 = arith.addf %193, %195 : vector<6x128xf32>
    %c0_76 = arith.constant 0 : index
    %c0_77 = arith.constant 0 : index
    %197 = vector.load %arg13[%c0_76, %c0_77] : memref<6x128xf32, #tpu.memory_space<vmem>>, vector<6x128xf32>
    tpu.vector_store %arg13[%c0_76, %c0_77], %196 {strides = array<i32>} : memref<6x128xf32, #tpu.memory_space<vmem>>, vector<6x128xf32>,
    %c0_78 = arith.constant 0 : index
    %c0_79 = arith.constant 0 : index
    %198 = vector.load %arg4[%c0_78, %c0_79] : memref<6x128xf32, #tpu.memory_space<vmem>>, vector<6x128xf32>
    %199 = arith.addf %196, %198 : vector<6x128xf32>
    %cst_80 = arith.constant dense<0xFF800000> : vector<6xf32>
    %200 = vector.multi_reduction <maximumf>, %199, %cst_80 [1] : vector<6x128xf32> to vector<6xf32>
    %201 = vector.shape_cast %200 : vector<6xf32> to vector<6x1xf32>
    %202 = tpu.iota {dimensions = array<i32: 1>} : vector<6x128xi32>
    %203 = vector.broadcast %201 : vector<6x1xf32> to vector<6x128xf32>
    %204 = arith.cmpf oeq, %199, %203 : vector<6x128xf32>
    %c128_i32 = arith.constant 128 : i32
    %205 = vector.broadcast %c128_i32 : i32 to vector<6x128xi32>
    %206 = arith.select %204, %202, %205 : vector<6x128xi1>, vector<6x128xi32>
    %cst_81 = arith.constant dense<2147483647> : vector<6xi32>
    %207 = vector.multi_reduction <minsi>, %206, %cst_81 [1] : vector<6x128xi32> to vector<6xi32>
    %208 = vector.shape_cast %207 : vector<6xi32> to vector<6x1xi32>
    %c0_82 = arith.constant 0 : index
    %c0_83 = arith.constant 0 : index
    %209 = vector.load %arg14[%c0_82, %c0_83] : memref<6x1xi32, #tpu.memory_space<vmem>>, vector<6x1xi32>
    tpu.vector_store %arg14[%c0_82, %c0_83], %208 {strides = array<i32>} : memref<6x1xi32, #tpu.memory_space<vmem>>, vector<6x1xi32>,
    return
  }
}

</mosaic_0001>

<llo_original>
// kernel: ne.21
$region0: #{ne.21}
  #allocation0 [shape = 's32[1]{0}', space=sflag, size = 0x4, scoped, tag = 'scoped memory for ne.21']
  %s0 = inlined_call_operand.vmem [shape: s32[6], index: 0, kind: input, shape index: {}]
  %s1 = inlined_call_operand.vmem [shape: s32[6], index: 1, kind: input, shape index: {}]
  %s2 = inlined_call_operand.vmem [shape: pred[6], index: 2, kind: output, shape index: {}]
  %v3 = vld [vmem:[%s0] sm:$0x1]
  %v4 = vld [vmem:[%s1] sm:$0x1]
  %5 = xla_tuple %v3, %v4
  %6 = xla_tuple %5
  %vm7 = vcmp.ne.s32.totalorder %v3, %v4
  %v8 = vsel %vm7, 1, 0
  %9 = xla_tuple %v8
  %v10 = vpack.c.b16 0, %v8
  %v11 = vpack.c.b8 0, %v10
  %13 = vst [vmem:[%s2] sm:$0x1] %v11

// kernel: electra_forward.3
$region0: #{electra_forward.3}
  #allocation0 [shape = 'u32[]', space=smem, size = 0x4, offset = 0x4, fixed_abs, tag = 'smem constant byte address 0x4 - core index']
  #allocation1 [shape = 'u32[144,128]{1,0:T(1,128)}', space=vmem, size = 0x12000, scoped, tag = 'internal scratch']
  %s0 = inlined_call_operand.vmem [shape: s32[16,1], index: 0, kind: input, shape index: {}]
  %s1 = inlined_call_operand.vmem [shape: f32[16,32], index: 1, kind: input, shape index: {}]
  %s2 = inlined_call_operand.vmem [shape: f32[16,16], index: 2, kind: input, shape index: {}]
  %s3 = inlined_call_operand.vmem [shape: bf16[128,32], index: 3, kind: input, shape index: {}]
  %s4 = inlined_call_operand.vmem [shape: bf16[32,96], index: 4, kind: input, shape index: {}]
  %s5 = inlined_call_operand.vmem [shape: bf16[32,32], index: 5, kind: input, shape index: {}]
  %s6 = inlined_call_operand.vmem [shape: bf16[32,128], index: 6, kind: input, shape index: {}]
  %s7 = inlined_call_operand.vmem [shape: bf16[128,32], index: 7, kind: input, shape index: {}]
  %s8 = inlined_call_operand.vmem [shape: bf16[32,32], index: 8, kind: input, shape index: {}]
  %s9 = inlined_call_operand.vmem [shape: f32[13,128], index: 9, kind: input, shape index: {}]
  %s10 = inlined_call_operand.vmem [shape: f32[16,1], index: 10, kind: output, shape index: {}]
  %s11 = sld [smem:[#allocation0]]
  $region50: #{electra_forward.3} parent=0
    _
  %s13 = ssub.s32 1, %s11
  %s14 = scalar_select 0, %s13, %s11
  // Predicated region
  $region2: #{electra_forward.3} parent=0 // pred_check
    _
  $region3: #{electra_forward.3} parent=0 // pred_check_branch
    %16 = sbr.rel (0) target = $region5
  $region4: #{electra_forward.3} parent=0 // pred_region
    _
  $region5: #{electra_forward.3} parent=0 // pred_fallthru
    _
  // Predicated region
  $region6: #{electra_forward.3} parent=0 // pred_check
    _
  $region7: #{electra_forward.3} parent=0 // pred_check_branch
    %18 = sbr.rel (0) target = $region9
  $region8: #{electra_forward.3} parent=0 // pred_region
    _
  $region9: #{electra_forward.3} parent=0 // pred_fallthru
    _
  // Predicated region
  $region10: #{electra_forward.3} parent=0 // pred_check
    _
  $region11: #{electra_forward.3} parent=0 // pred_check_branch
    %20 = sbr.rel (0) target = $region13
  $region12: #{electra_forward.3} parent=0 // pred_region
    _
  $region13: #{electra_forward.3} parent=0 // pred_fallthru
    _
  // Predicated region
  $region14: #{electra_forward.3} parent=0 // pred_check
    _
  $region15: #{electra_forward.3} parent=0 // pred_check_branch
    %22 = sbr.rel (0) target = $region17
  $region16: #{electra_forward.3} parent=0 // pred_region
    _
  $region17: #{electra_forward.3} parent=0 // pred_fallthru
    _
  // Predicated region
  $region18: #{electra_forward.3} parent=0 // pred_check
    _
  $region19: #{electra_forward.3} parent=0 // pred_check_branch
    %24 = sbr.rel (0) target = $region21
  $region20: #{electra_forward.3} parent=0 // pred_region
    _
  $region21: #{electra_forward.3} parent=0 // pred_fallthru
    _
  // Predicated region
  $region22: #{electra_forward.3} parent=0 // pred_check
    _
  $region23: #{electra_forward.3} parent=0 // pred_check_branch
    %26 = sbr.rel (0) target = $region25
  $region24: #{electra_forward.3} parent=0 // pred_region
    _
  $region25: #{electra_forward.3} parent=0 // pred_fallthru
    _
  // Predicated region
  $region26: #{electra_forward.3} parent=0 // pred_check
    _
  $region27: #{electra_forward.3} parent=0 // pred_check_branch
    %28 = sbr.rel (0) target = $region29
  $region28: #{electra_forward.3} parent=0 // pred_region
    _
  $region29: #{electra_forward.3} parent=0 // pred_fallthru
    _
  // Predicated region
  $region30: #{electra_forward.3} parent=0 // pred_check
    _
  $region31: #{electra_forward.3} parent=0 // pred_check_branch
    %30 = sbr.rel (0) target = $region33
  $region32: #{electra_forward.3} parent=0 // pred_region
    _
  $region33: #{electra_forward.3} parent=0 // pred_fallthru
    _
  // Predicated region
  $region34: #{electra_forward.3} parent=0 // pred_check
    _
  $region35: #{electra_forward.3} parent=0 // pred_check_branch
    %32 = sbr.rel (0) target = $region37
  $region36: #{electra_forward.3} parent=0 // pred_region
    _
  $region37: #{electra_forward.3} parent=0 // pred_fallthru
    _
  // Predicated region
  $region38: #{electra_forward.3} parent=0 // pred_check
    _
  $region39: #{electra_forward.3} parent=0 // pred_check_branch
    %34 = sbr.rel (0) target = $region41
  $region40: #{electra_forward.3} parent=0 // pred_region
    _
  $region41: #{electra_forward.3} parent=0 // pred_fallthru
    _
  %v36 = vld [vmem:[%s0] sm:$0xff]
  %v37 = vld [vmem:[%s0 + $0x8] sm:$0xff]
  %v38 = vlaneseq
  %v39 = vand.u32 %v38, 127
  %40 = vset.pattern.permute.xlu0 0
  %41 = vperm.xlu0 %40, %v36
  %v42 = vpop.permute.xlu0 %41
  %43 = vset.pattern.permute.xlu0 0
  %44 = vperm.xlu0 %43, %v37
  %v45 = vpop.permute.xlu0 %44
  %vm46 = vcmp.eq.s32.totalorder %v39, %v42
  %vm47 = vcmp.eq.s32.totalorder %v39, %v45
  %v48 = vsel %vm46, 1, 0
  %v49 = vsel %vm47, 1, 0
  %v50 = vcvt.s32.f32 %v48
  %v51 = vcvt.s32.f32 %v49
  %v52 = vpack.c.bf16 %v51, %v50
  %v53 = vld [vmem:[%s3] sm:$0xf]
  %v54 = vld [vmem:[%s3 + $0x4] sm:$0xf]
  %v55 = vld [vmem:[%s3 + $0x8] sm:$0xf]
  %v56 = vld [vmem:[%s3 + $0xc] sm:$0xf]
  %v57 = vld [vmem:[%s3 + $0x10] sm:$0xf]
  %v58 = vld [vmem:[%s3 + $0x14] sm:$0xf]
  %v59 = vld [vmem:[%s3 + $0x18] sm:$0xf]
  %v60 = vld [vmem:[%s3 + $0x1c] sm:$0xf]
  %v61 = vld [vmem:[%s3 + $0x20] sm:$0xf]
  %v62 = vld [vmem:[%s3 + $0x24] sm:$0xf]
  %v63 = vld [vmem:[%s3 + $0x28] sm:$0xf]
  %v64 = vld [vmem:[%s3 + $0x2c] sm:$0xf]
  %v65 = vld [vmem:[%s3 + $0x30] sm:$0xf]
  %v66 = vld [vmem:[%s3 + $0x34] sm:$0xf]
  %v67 = vld [vmem:[%s3 + $0x38] sm:$0xf]
  %v68 = vld [vmem:[%s3 + $0x3c] sm:$0xf]
  %v69 = vld [vmem:[%s1] sm:$0xff]
  %v70 = vld [vmem:[%s1 + $0x8] sm:$0xff]
  %v87 = vunpack.c.l.b16 %v53
  %v88 = vunpack.c.l.b16 %v54
  %v89 = vunpack.c.l.b16 %v55
  %v90 = vunpack.c.l.b16 %v56
  %v91 = vunpack.c.l.b16 %v57
  %v92 = vunpack.c.l.b16 %v58
  %v93 = vunpack.c.l.b16 %v59
  %v94 = vunpack.c.l.b16 %v60
  %v95 = vunpack.c.l.b16 %v61
  %v96 = vunpack.c.l.b16 %v62
  %v97 = vunpack.c.l.b16 %v63
  %v98 = vunpack.c.l.b16 %v64
  %v99 = vunpack.c.l.b16 %v65
  %v100 = vunpack.c.l.b16 %v66
  %v101 = vunpack.c.l.b16 %v67
  %v102 = vunpack.c.l.b16 %v68
  %v103 = vpack.c.b16 %v88, %v87
  %v104 = vpack.c.b16 %v90, %v89
  %v105 = vpack.c.b16 %v92, %v91
  %v106 = vpack.c.b16 %v94, %v93
  %v107 = vpack.c.b16 %v96, %v95
  %v108 = vpack.c.b16 %v98, %v97
  %v109 = vpack.c.b16 %v100, %v99
  %v110 = vpack.c.b16 %v102, %v101
  %119 = vmatprep.subr.bf16.mxu0 0
  %120 = vmatpush1.bf16.msra.mxu0 %v103
  %121 = vmatprep.subr.bf16.mxu0 0
  %122 = vmatpush1.bf16.msra.mxu0 %v104
  %123 = vmatprep.subr.bf16.mxu0 0
  %124 = vmatpush1.bf16.msra.mxu0 %v105
  %125 = vmatprep.subr.bf16.mxu0 0
  %126 = vmatpush1.bf16.msra.mxu0 %v106
  %127 = vmatprep.subr.bf16.mxu0 0
  %128 = vmatpush1.bf16.msra.mxu0 %v107
  %129 = vmatprep.subr.bf16.mxu0 0
  %130 = vmatpush1.bf16.msra.mxu0 %v108
  %131 = vmatprep.subr.bf16.mxu0 0
  %132 = vmatpush1.bf16.msra.mxu0 %v109
  %133 = vmatprep.subr.bf16.mxu0 0
  %134 = vmatpush1.bf16.msra.mxu0 %v110
  %135 = vmatprep.subr.bf16.mxu0 0
  %136 = vmatpush1.bf16.msra.mxu0 0
  %137 = vmatprep.subr.bf16.mxu0 0
  %138 = vmatpush1.bf16.msra.mxu0 0
  %139 = vmatprep.subr.bf16.mxu0 0
  %140 = vmatpush1.bf16.msra.mxu0 0
  %141 = vmatprep.subr.bf16.mxu0 0
  %142 = vmatpush1.bf16.msra.mxu0 0
  %143 = vmatprep.subr.bf16.mxu0 0
  %144 = vmatpush1.bf16.msra.mxu0 0
  %145 = vmatprep.subr.bf16.mxu0 0
  %146 = vmatpush1.bf16.msra.mxu0 0
  %147 = vmatprep.subr.bf16.mxu0 0
  %148 = vmatpush1.bf16.msra.mxu0 0
  %149 = vmatprep.subr.bf16.mxu0 0
  %150 = vmatpush1.bf16.msra.mxu0 0
  %151 = vmatprep.mubr.bf16.mxu0 0
  %152 = vmatmul.mubr.bf16.gmra.mrb[0].mxu0 %v52
  %v153 = vpop.f32.mrb[0].mxu0
  %v154 = vadd.f32 %v69, %v153
  %v155 = vpop.f32.mrb[0].mxu0
  %v156 = vpop.f32.mrb[0].mxu0
  %v157 = vadd.f32 %v70, %v156
  %v158 = vpop.f32.mrb[0].mxu0
  %159 = vdwg.mxu0
  %v160 = vld [vmem:[%s9] sm:$0x1]
  %v161 = vld [vmem:[%s9 + $0x1] sm:$0x1]
  %vm162 = vcmask 261120
  %v163 = vsel %vm162, %v154, 0.0
  %164 = vadd.xlane.f32.xlu0 %v163
  %v165 = vpop.xlane.xlu0 %164
  %v166 = vsel %vm162, %v157, 0.0
  %167 = vadd.xlane.f32.xlu0 %v166
  %v168 = vpop.xlane.xlu0 %167
  %v169 = vrcp.pop 32.0
  %v170 = vmul.f32 %v165, %v169
  %v171 = vmul.f32 %v168, %v169
  %v172 = vsub.f32 %v154, %v170
  %v173 = vsub.f32 %v157, %v171
  %v174 = vmul.f32 %v172, %v172
  %v175 = vmul.f32 %v173, %v173
  %v176 = vsel %vm162, %v174, 0.0
  %177 = vadd.xlane.f32.xlu0 %v176
  %v178 = vpop.xlane.xlu0 %177
  %v179 = vsel %vm162, %v175, 0.0
  %180 = vadd.xlane.f32.xlu0 %v179
  %v181 = vpop.xlane.xlu0 %180
  %v182 = vmul.f32 %v178, %v169
  %v183 = vmul.f32 %v181, %v169
  %v184 = vadd.f32 %v182, 1e-12
  %v185 = vadd.f32 %v183, 1e-12
  %v186 = vrsqrt.pop %v184
  %v187 = vrsqrt.pop %v185
  %v188 = vmul.f32 %v172, %v186
  %v189 = vmul.f32 %v173, %v187
  %v190 = vlaneseq
  %v191 = vshrl.u32 %v190, 7
  %v192 = vsub.s32 0, %v191
  %v193 = vrot.slane %v160, %v192
  %v194 = vmul.f32 %v188, %v193
  %v195 = vmul.f32 %v189, %v193
  %v196 = vlaneseq
  %v197 = vshrl.u32 %v196, 7
  %v198 = vsub.s32 0, %v197
  %v199 = vrot.slane %v161, %v198
  %v200 = vadd.f32 %v194, %v199
  %v201 = vadd.f32 %v195, %v199
  %v202 = vpack.c.bf16 %v201, %v200
  %v203 = vld [vmem:[%s4] sm:$0xf]
  %v204 = vld [vmem:[%s4 + $0x4] sm:$0xf]
  %v205 = vld [vmem:[%s4 + $0x8] sm:$0xf]
  %v206 = vld [vmem:[%s4 + $0xc] sm:$0xf]
  %v207 = vld [vmem:[%s9 + $0x2] sm:$0x1]
  %v208 = vlaneseq
  %v209 = vshrl.u32 %v208, 7
  %v210 = vsub.s32 0, %v209
  %v211 = vrot.slane %v207, %v210
  %v216 = vunpack.c.l.b16 %v203
  %v217 = vunpack.c.l.b16 %v204
  %v218 = vunpack.c.l.b16 %v205
  %v219 = vunpack.c.l.b16 %v206
  %v220 = vpack.c.b16 %v217, %v216
  %v221 = vpack.c.b16 %v219, %v218
  %v225 = vsel %vm162, %v202, 0
  %227 = vmatprep.subr.bf16.mxu0 0
  %228 = vmatpush1.bf16.msra.mxu0 %v220
  %229 = vmatprep.subr.bf16.mxu0 0
  %230 = vmatpush1.bf16.msra.mxu0 %v221
  %231 = vmatprep.subr.bf16.mxu0 0
  %232 = vmatpush1.bf16.msra.mxu0 0
  %233 = vmatprep.subr.bf16.mxu0 0
  %234 = vmatpush1.bf16.msra.mxu0 0
  %235 = vmatprep.subr.bf16.mxu0 0
  %236 = vmatpush1.bf16.msra.mxu0 0
  %237 = vmatprep.subr.bf16.mxu0 0
  %238 = vmatpush1.bf16.msra.mxu0 0
  %239 = vmatprep.subr.bf16.mxu0 0
  %240 = vmatpush1.bf16.msra.mxu0 0
  %241 = vmatprep.subr.bf16.mxu0 0
  %242 = vmatpush1.bf16.msra.mxu0 0
  %243 = vmatprep.subr.bf16.mxu0 0
  %244 = vmatpush1.bf16.msra.mxu0 0
  %245 = vmatprep.subr.bf16.mxu0 0
  %246 = vmatpush1.bf16.msra.mxu0 0
  %247 = vmatprep.subr.bf16.mxu0 0
  %248 = vmatpush1.bf16.msra.mxu0 0
  %249 = vmatprep.subr.bf16.mxu0 0
  %250 = vmatpush1.bf16.msra.mxu0 0
  %251 = vmatprep.subr.bf16.mxu0 0
  %252 = vmatpush1.bf16.msra.mxu0 0
  %253 = vmatprep.subr.bf16.mxu0 0
  %254 = vmatpush1.bf16.msra.mxu0 0
  %255 = vmatprep.subr.bf16.mxu0 0
  %256 = vmatpush1.bf16.msra.mxu0 0
  %257 = vmatprep.subr.bf16.mxu0 0
  %258 = vmatpush1.bf16.msra.mxu0 0
  %259 = vmatprep.mubr.bf16.mxu0 0
  %260 = vmatmul.mubr.bf16.gmra.mrb[0].mxu0 %v225
  %v261 = vpop.f32.mrb[0].mxu0
  %v262 = vadd.f32 %v211, %v261
  %v263 = vpop.f32.mrb[0].mxu0
  %v264 = vpop.f32.mrb[0].mxu0
  %v265 = vadd.f32 %v211, %v264
  %v266 = vpop.f32.mrb[0].mxu0
  %267 = vdwg.mxu0
  %v268 = vpack.c.bf16 %v265, %v262
  %270 = vrot.lane.b32.xlu0 %v268, 96
  %v271 = vpop.permute.xlu0 %270
  %v273 = vsel %vm162, %v268, 0
  %v276 = vsel %vm162, %v271, 0
  %278 = vmatprep.subr.bf16.mxu0 0
  %279 = vmatpush1.bf16.xpose.msra.mxu0 %v276
  %280 = vmatprep.subr.bf16.mxu0 0
  %281 = vmatpush1.bf16.xpose.msra.mxu0 0
  %282 = vmatprep.subr.bf16.mxu0 0
  %283 = vmatpush1.bf16.xpose.msra.mxu0 0
  %284 = vmatprep.subr.bf16.mxu0 0
  %285 = vmatpush1.bf16.xpose.msra.mxu0 0
  %286 = vmatprep.subr.bf16.mxu0 0
  %287 = vmatpush1.bf16.xpose.msra.mxu0 0
  %288 = vmatprep.subr.bf16.mxu0 0
  %289 = vmatpush1.bf16.xpose.msra.mxu0 0
  %290 = vmatprep.subr.bf16.mxu0 0
  %291 = vmatpush1.bf16.xpose.msra.mxu0 0
  %292 = vmatprep.subr.bf16.mxu0 0
  %293 = vmatpush1.bf16.xpose.msra.mxu0 0
  %294 = vmatprep.subr.bf16.mxu0 0
  %295 = vmatpush1.bf16.xpose.msra.mxu0 0
  %296 = vmatprep.subr.bf16.mxu0 0
  %297 = vmatpush1.bf16.xpose.msra.mxu0 0
  %298 = vmatprep.subr.bf16.mxu0 0
  %299 = vmatpush1.bf16.xpose.msra.mxu0 0
  %300 = vmatprep.subr.bf16.mxu0 0
  %301 = vmatpush1.bf16.xpose.msra.mxu0 0
  %302 = vmatprep.subr.bf16.mxu0 0
  %303 = vmatpush1.bf16.xpose.msra.mxu0 0
  %304 = vmatprep.subr.bf16.mxu0 0
  %305 = vmatpush1.bf16.xpose.msra.mxu0 0
  %306 = vmatprep.subr.bf16.mxu0 0
  %307 = vmatpush1.bf16.xpose.msra.mxu0 0
  %308 = vmatprep.subr.bf16.mxu0 0
  %309 = vmatpush1.bf16.xpose.msra.mxu0 0
  %310 = vmatprep.mubr.bf16.mxu0 0
  %311 = vmatmul.mubr.bf16.gmra.mrb[0].mxu0 %v273
  %v312 = vpop.f32.mrb[0].mxu0
  %v313 = vadd.f32 0.0, %v312
  %v314 = vpop.f32.mrb[0].mxu0
  %v315 = vpop.f32.mrb[0].mxu0
  %v316 = vadd.f32 0.0, %v315
  %v317 = vpop.f32.mrb[0].mxu0
  %318 = vdwg.mxu0
  %v319 = vmul.f32 %v313, 0.17677669
  %v320 = vmul.f32 %v316, 0.17677669
  %v321 = vld [vmem:[%s2] sm:$0xff]
  %v322 = vld [vmem:[%s2 + $0x8] sm:$0xff]
  %v323 = vadd.f32 %v319, %v321
  %v324 = vadd.f32 %v320, %v322
  %vm325 = vcmask 130048
  %v326 = vsel %vm325, %v323, -inf
  %327 = vmax.xlane.f32.xlu0 %v326
  %v328 = vpop.xlane.xlu0 %327
  %v329 = vsel %vm325, %v324, -inf
  %330 = vmax.xlane.f32.xlu0 %v329
  %v331 = vpop.xlane.xlu0 %330
  %v332 = vsub.f32 %v323, %v328
  %v333 = vsub.f32 %v324, %v331
  %v334 = vmul.f32 %v332, 1.442695
  %v335 = vpow.pop %v334
  %v336 = vmul.f32 %v333, 1.442695
  %v337 = vpow.pop %v336
  %v338 = vsel %vm325, %v335, 0.0
  %339 = vadd.xlane.f32.xlu0 %v338
  %v340 = vpop.xlane.xlu0 %339
  %v341 = vsel %vm325, %v337, 0.0
  %342 = vadd.xlane.f32.xlu0 %v341
  %v343 = vpop.xlane.xlu0 %342
  %v344 = vrcp.pop %v340
  %v345 = vrcp.pop %v343
  %v346 = vmul.f32 %v335, %v344
  %v347 = vmul.f32 %v337, %v345
  %v348 = vpack.c.bf16 %v347, %v346
  %349 = vrot.lane.b32.xlu0 %v268, 64
  %v350 = vpop.permute.xlu0 %349
  %v353 = vsel %vm325, %v348, 0
  %355 = vmatprep.subr.bf16.mxu0 0
  %356 = vmatpush1.bf16.msra.mxu0 %v350
  %357 = vmatprep.subr.bf16.mxu0 0
  %358 = vmatpush1.bf16.msra.mxu0 0
  %359 = vmatprep.subr.bf16.mxu0 0
  %360 = vmatpush1.bf16.msra.mxu0 0
  %361 = vmatprep.subr.bf16.mxu0 0
  %362 = vmatpush1.bf16.msra.mxu0 0
  %363 = vmatprep.subr.bf16.mxu0 0
  %364 = vmatpush1.bf16.msra.mxu0 0
  %365 = vmatprep.subr.bf16.mxu0 0
  %366 = vmatpush1.bf16.msra.mxu0 0
  %367 = vmatprep.subr.bf16.mxu0 0
  %368 = vmatpush1.bf16.msra.mxu0 0
  %369 = vmatprep.subr.bf16.mxu0 0
  %370 = vmatpush1.bf16.msra.mxu0 0
  %371 = vmatprep.subr.bf16.mxu0 0
  %372 = vmatpush1.bf16.msra.mxu0 0
  %373 = vmatprep.subr.bf16.mxu0 0
  %374 = vmatpush1.bf16.msra.mxu0 0
  %375 = vmatprep.subr.bf16.mxu0 0
  %376 = vmatpush1.bf16.msra.mxu0 0
  %377 = vmatprep.subr.bf16.mxu0 0
  %378 = vmatpush1.bf16.msra.mxu0 0
  %379 = vmatprep.subr.bf16.mxu0 0
  %380 = vmatpush1.bf16.msra.mxu0 0
  %381 = vmatprep.subr.bf16.mxu0 0
  %382 = vmatpush1.bf16.msra.mxu0 0
  %383 = vmatprep.subr.bf16.mxu0 0
  %384 = vmatpush1.bf16.msra.mxu0 0
  %385 = vmatprep.subr.bf16.mxu0 0
  %386 = vmatpush1.bf16.msra.mxu0 0
  %387 = vmatprep.mubr.bf16.mxu0 0
  %388 = vmatmul.mubr.bf16.gmra.mrb[0].mxu0 %v353
  %v389 = vpop.f32.mrb[0].mxu0
  %v390 = vadd.f32 0.0, %v389
  %v391 = vpop.f32.mrb[0].mxu0
  %v392 = vpop.f32.mrb[0].mxu0
  %v393 = vadd.f32 0.0, %v392
  %v394 = vpop.f32.mrb[0].mxu0
  %395 = vdwg.mxu0
  %v396 = vpack.c.bf16 %v393, %v390
  %v397 = vld [vmem:[%s5] sm:$0xf]
  %v398 = vld [vmem:[%s5 + $0x4] sm:$0xf]
  %v399 = vld [vmem:[%s5 + $0x8] sm:$0xf]
  %v400 = vld [vmem:[%s5 + $0xc] sm:$0xf]
  %v401 = vld [vmem:[%s9 + $0x3] sm:$0x1]
  %v402 = vlaneseq
  %v403 = vshrl.u32 %v402, 7
  %v404 = vsub.s32 0, %v403
  %v405 = vrot.slane %v401, %v404
  %v410 = vunpack.c.l.b16 %v397
  %v411 = vunpack.c.l.b16 %v398
  %v412 = vunpack.c.l.b16 %v399
  %v413 = vunpack.c.l.b16 %v400
  %v414 = vpack.c.b16 %v411, %v410
  %v415 = vpack.c.b16 %v413, %v412
  %v419 = vsel %vm162, %v396, 0
  %421 = vmatprep.subr.bf16.mxu0 0
  %422 = vmatpush1.bf16.msra.mxu0 %v414
  %423 = vmatprep.subr.bf16.mxu0 0
  %424 = vmatpush1.bf16.msra.mxu0 %v415
  %425 = vmatprep.subr.bf16.mxu0 0
  %426 = vmatpush1.bf16.msra.mxu0 0
  %427 = vmatprep.subr.bf16.mxu0 0
  %428 = vmatpush1.bf16.msra.mxu0 0
  %429 = vmatprep.subr.bf16.mxu0 0
  %430 = vmatpush1.bf16.msra.mxu0 0
  %431 = vmatprep.subr.bf16.mxu0 0
  %432 = vmatpush1.bf16.msra.mxu0 0
  %433 = vmatprep.subr.bf16.mxu0 0
  %434 = vmatpush1.bf16.msra.mxu0 0
  %435 = vmatprep.subr.bf16.mxu0 0
  %436 = vmatpush1.bf16.msra.mxu0 0
  %437 = vmatprep.subr.bf16.mxu0 0
  %438 = vmatpush1.bf16.msra.mxu0 0
  %439 = vmatprep.subr.bf16.mxu0 0
  %440 = vmatpush1.bf16.msra.mxu0 0
  %441 = vmatprep.subr.bf16.mxu0 0
  %442 = vmatpush1.bf16.msra.mxu0 0
  %443 = vmatprep.subr.bf16.mxu0 0
  %444 = vmatpush1.bf16.msra.mxu0 0
  %445 = vmatprep.subr.bf16.mxu0 0
  %446 = vmatpush1.bf16.msra.mxu0 0
  %447 = vmatprep.subr.bf16.mxu0 0
  %448 = vmatpush1.bf16.msra.mxu0 0
  %449 = vmatprep.subr.bf16.mxu0 0
  %450 = vmatpush1.bf16.msra.mxu0 0
  %451 = vmatprep.subr.bf16.mxu0 0
  %452 = vmatpush1.bf16.msra.mxu0 0
  %453 = vmatprep.mubr.bf16.mxu0 0
  %454 = vmatmul.mubr.bf16.gmra.mrb[0].mxu0 %v419
  %v455 = vpop.f32.mrb[0].mxu0
  %v456 = vadd.f32 %v405, %v455
  %v457 = vpop.f32.mrb[0].mxu0
  %v458 = vpop.f32.mrb[0].mxu0
  %v459 = vadd.f32 %v405, %v458
  %v460 = vpop.f32.mrb[0].mxu0
  %461 = vdwg.mxu0
  %v462 = vadd.f32 %v200, %v456
  %v463 = vadd.f32 %v201, %v459
  %v464 = vld [vmem:[%s9 + $0x4] sm:$0x1]
  %v465 = vld [vmem:[%s9 + $0x5] sm:$0x1]
  %v466 = vsel %vm162, %v462, 0.0
  %467 = vadd.xlane.f32.xlu0 %v466
  %v468 = vpop.xlane.xlu0 %467
  %v469 = vsel %vm162, %v463, 0.0
  %470 = vadd.xlane.f32.xlu0 %v469
  %v471 = vpop.xlane.xlu0 %470
  %v472 = vmul.f32 %v468, %v169
  %v473 = vmul.f32 %v471, %v169
  %v474 = vsub.f32 %v462, %v472
  %v475 = vsub.f32 %v463, %v473
  %v476 = vmul.f32 %v474, %v474
  %v477 = vmul.f32 %v475, %v475
  %v478 = vsel %vm162, %v476, 0.0
  %479 = vadd.xlane.f32.xlu0 %v478
  %v480 = vpop.xlane.xlu0 %479
  %v481 = vsel %vm162, %v477, 0.0
  %482 = vadd.xlane.f32.xlu0 %v481
  %v483 = vpop.xlane.xlu0 %482
  %v484 = vmul.f32 %v480, %v169
  %v485 = vmul.f32 %v483, %v169
  %v486 = vadd.f32 %v484, 1e-12
  %v487 = vadd.f32 %v485, 1e-12
  %v488 = vrsqrt.pop %v486
  %v489 = vrsqrt.pop %v487
  %v490 = vmul.f32 %v474, %v488
  %v491 = vmul.f32 %v475, %v489
  %v492 = vlaneseq
  %v493 = vshrl.u32 %v492, 7
  %v494 = vsub.s32 0, %v493
  %v495 = vrot.slane %v464, %v494
  %v496 = vmul.f32 %v490, %v495
  %v497 = vmul.f32 %v491, %v495
  %v498 = vlaneseq
  %v499 = vshrl.u32 %v498, 7
  %v500 = vsub.s32 0, %v499
  %v501 = vrot.slane %v465, %v500
  %v502 = vadd.f32 %v496, %v501
  %v503 = vadd.f32 %v497, %v501
  %v504 = vpack.c.bf16 %v503, %v502
  %v505 = vld [vmem:[%s6] sm:$0xf]
  %v506 = vld [vmem:[%s6 + $0x4] sm:$0xf]
  %v507 = vld [vmem:[%s6 + $0x8] sm:$0xf]
  %v508 = vld [vmem:[%s6 + $0xc] sm:$0xf]
  %v509 = vld [vmem:[%s9 + $0x6] sm:$0x1]
  %v510 = vlaneseq
  %v511 = vshrl.u32 %v510, 7
  %v512 = vsub.s32 0, %v511
  %v513 = vrot.slane %v509, %v512
  %v518 = vunpack.c.l.b16 %v505
  %v519 = vunpack.c.l.b16 %v506
  %v520 = vunpack.c.l.b16 %v507
  %v521 = vunpack.c.l.b16 %v508
  %v522 = vpack.c.b16 %v519, %v518
  %v523 = vpack.c.b16 %v521, %v520
  %v527 = vsel %vm162, %v504, 0
  %529 = vmatprep.subr.bf16.mxu0 0
  %530 = vmatpush1.bf16.msra.mxu0 %v522
  %531 = vmatprep.subr.bf16.mxu0 0
  %532 = vmatpush1.bf16.msra.mxu0 %v523
  %533 = vmatprep.subr.bf16.mxu0 0
  %534 = vmatpush1.bf16.msra.mxu0 0
  %535 = vmatprep.subr.bf16.mxu0 0
  %536 = vmatpush1.bf16.msra.mxu0 0
  %537 = vmatprep.subr.bf16.mxu0 0
  %538 = vmatpush1.bf16.msra.mxu0 0
  %539 = vmatprep.subr.bf16.mxu0 0
  %540 = vmatpush1.bf16.msra.mxu0 0
  %541 = vmatprep.subr.bf16.mxu0 0
  %542 = vmatpush1.bf16.msra.mxu0 0
  %543 = vmatprep.subr.bf16.mxu0 0
  %544 = vmatpush1.bf16.msra.mxu0 0
  %545 = vmatprep.subr.bf16.mxu0 0
  %546 = vmatpush1.bf16.msra.mxu0 0
  %547 = vmatprep.subr.bf16.mxu0 0
  %548 = vmatpush1.bf16.msra.mxu0 0
  %549 = vmatprep.subr.bf16.mxu0 0
  %550 = vmatpush1.bf16.msra.mxu0 0
  %551 = vmatprep.subr.bf16.mxu0 0
  %552 = vmatpush1.bf16.msra.mxu0 0
  %553 = vmatprep.subr.bf16.mxu0 0
  %554 = vmatpush1.bf16.msra.mxu0 0
  %555 = vmatprep.subr.bf16.mxu0 0
  %556 = vmatpush1.bf16.msra.mxu0 0
  %557 = vmatprep.subr.bf16.mxu0 0
  %558 = vmatpush1.bf16.msra.mxu0 0
  %559 = vmatprep.subr.bf16.mxu0 0
  %560 = vmatpush1.bf16.msra.mxu0 0
  %561 = vmatprep.mubr.bf16.mxu0 0
  %562 = vmatmul.mubr.bf16.gmra.mrb[0].mxu0 %v527
  %v563 = vpop.f32.mrb[0].mxu0
  %v564 = vadd.f32 %v513, %v563
  %v565 = vpop.f32.mrb[0].mxu0
  %v566 = vpop.f32.mrb[0].mxu0
  %v567 = vadd.f32 %v513, %v566
  %v568 = vpop.f32.mrb[0].mxu0
  %569 = vdwg.mxu0
  %v570 = vmul.f32 %v564, 0.5
  %v571 = vmul.f32 %v567, 0.5
  %v572 = vmul.f32 %v564, 0.044715
  %v573 = vmul.f32 %v567, 0.044715
  %v574 = vmul.f32 %v572, %v564
  %v575 = vmul.f32 %v573, %v567
  %v576 = vmul.f32 %v574, %v564
  %v577 = vmul.f32 %v575, %v567
  %v578 = vadd.f32 %v564, %v576
  %v579 = vadd.f32 %v567, %v577
  %v580 = vmul.f32 %v578, 0.7978846
  %v581 = vmul.f32 %v579, 0.7978846
  %v582 = vtanh.pop %v580
  %v583 = vtanh.pop %v581
  %v584 = vadd.f32 %v582, 1.0
  %v585 = vadd.f32 %v583, 1.0
  %v586 = vmul.f32 %v570, %v584
  %v587 = vmul.f32 %v571, %v585
  %v588 = vpack.c.bf16 %v587, %v586
  %v589 = vld [vmem:[%s7] sm:$0xf]
  %v590 = vld [vmem:[%s7 + $0x4] sm:$0xf]
  %v591 = vld [vmem:[%s7 + $0x8] sm:$0xf]
  %v592 = vld [vmem:[%s7 + $0xc] sm:$0xf]
  %v593 = vld [vmem:[%s7 + $0x10] sm:$0xf]
  %v594 = vld [vmem:[%s7 + $0x14] sm:$0xf]
  %v595 = vld [vmem:[%s7 + $0x18] sm:$0xf]
  %v596 = vld [vmem:[%s7 + $0x1c] sm:$0xf]
  %v597 = vld [vmem:[%s7 + $0x20] sm:$0xf]
  %v598 = vld [vmem:[%s7 + $0x24] sm:$0xf]
  %v599 = vld [vmem:[%s7 + $0x28] sm:$0xf]
  %v600 = vld [vmem:[%s7 + $0x2c] sm:$0xf]
  %v601 = vld [vmem:[%s7 + $0x30] sm:$0xf]
  %v602 = vld [vmem:[%s7 + $0x34] sm:$0xf]
  %v603 = vld [vmem:[%s7 + $0x38] sm:$0xf]
  %v604 = vld [vmem:[%s7 + $0x3c] sm:$0xf]
  %v605 = vld [vmem:[%s9 + $0x7] sm:$0x1]
  %v606 = vlaneseq
  %v607 = vshrl.u32 %v606, 7
  %v608 = vsub.s32 0, %v607
  %v609 = vrot.slane %v605, %v608
  %v626 = vunpack.c.l.b16 %v589
  %v627 = vunpack.c.l.b16 %v590
  %v628 = vunpack.c.l.b16 %v591
  %v629 = vunpack.c.l.b16 %v592
  %v630 = vunpack.c.l.b16 %v593
  %v631 = vunpack.c.l.b16 %v594
  %v632 = vunpack.c.l.b16 %v595
  %v633 = vunpack.c.l.b16 %v596
  %v634 = vunpack.c.l.b16 %v597
  %v635 = vunpack.c.l.b16 %v598
  %v636 = vunpack.c.l.b16 %v599
  %v637 = vunpack.c.l.b16 %v600
  %v638 = vunpack.c.l.b16 %v601
  %v639 = vunpack.c.l.b16 %v602
  %v640 = vunpack.c.l.b16 %v603
  %v641 = vunpack.c.l.b16 %v604
  %v642 = vpack.c.b16 %v627, %v626
  %v643 = vpack.c.b16 %v629, %v628
  %v644 = vpack.c.b16 %v631, %v630
  %v645 = vpack.c.b16 %v633, %v632
  %v646 = vpack.c.b16 %v635, %v634
  %v647 = vpack.c.b16 %v637, %v636
  %v648 = vpack.c.b16 %v639, %v638
  %v649 = vpack.c.b16 %v641, %v640
  %658 = vmatprep.subr.bf16.mxu0 0
  %659 = vmatpush1.bf16.msra.mxu0 %v642
  %660 = vmatprep.subr.bf16.mxu0 0
  %661 = vmatpush1.bf16.msra.mxu0 %v643
  %662 = vmatprep.subr.bf16.mxu0 0
  %663 = vmatpush1.bf16.msra.mxu0 %v644
  %664 = vmatprep.subr.bf16.mxu0 0
  %665 = vmatpush1.bf16.msra.mxu0 %v645
  %666 = vmatprep.subr.bf16.mxu0 0
  %667 = vmatpush1.bf16.msra.mxu0 %v646
  %668 = vmatprep.subr.bf16.mxu0 0
  %669 = vmatpush1.bf16.msra.mxu0 %v647
  %670 = vmatprep.subr.bf16.mxu0 0
  %671 = vmatpush1.bf16.msra.mxu0 %v648
  %672 = vmatprep.subr.bf16.mxu0 0
  %673 = vmatpush1.bf16.msra.mxu0 %v649
  %674 = vmatprep.subr.bf16.mxu0 0
  %675 = vmatpush1.bf16.msra.mxu0 0
  %676 = vmatprep.subr.bf16.mxu0 0
  %677 = vmatpush1.bf16.msra.mxu0 0
  %678 = vmatprep.subr.bf16.mxu0 0
  %679 = vmatpush1.bf16.msra.mxu0 0
  %680 = vmatprep.subr.bf16.mxu0 0
  %681 = vmatpush1.bf16.msra.mxu0 0
  %682 = vmatprep.subr.bf16.mxu0 0
  %683 = vmatpush1.bf16.msra.mxu0 0
  %684 = vmatprep.subr.bf16.mxu0 0
  %685 = vmatpush1.bf16.msra.mxu0 0
  %686 = vmatprep.subr.bf16.mxu0 0
  %687 = vmatpush1.bf16.msra.mxu0 0
  %688 = vmatprep.subr.bf16.mxu0 0
  %689 = vmatpush1.bf16.msra.mxu0 0
  %690 = vmatprep.mubr.bf16.mxu0 0
  %691 = vmatmul.mubr.bf16.gmra.mrb[0].mxu0 %v588
  %v692 = vpop.f32.mrb[0].mxu0
  %v693 = vadd.f32 %v609, %v692
  %v694 = vpop.f32.mrb[0].mxu0
  %v695 = vpop.f32.mrb[0].mxu0
  %v696 = vadd.f32 %v609, %v695
  %v697 = vpop.f32.mrb[0].mxu0
  %698 = vdwg.mxu0
  %v699 = vadd.f32 %v502, %v693
  %v700 = vadd.f32 %v503, %v696
  %v701 = vld [vmem:[%s9 + $0x8] sm:$0x1]
  %v702 = vld [vmem:[%s9 + $0x9] sm:$0x1]
  %v703 = vsel %vm162, %v699, 0.0
  %704 = vadd.xlane.f32.xlu0 %v703
  %v705 = vpop.xlane.xlu0 %704
  %v706 = vsel %vm162, %v700, 0.0
  %707 = vadd.xlane.f32.xlu0 %v706
  %v708 = vpop.xlane.xlu0 %707
  %v709 = vmul.f32 %v705, %v169
  %v710 = vmul.f32 %v708, %v169
  %v711 = vsub.f32 %v699, %v709
  %v712 = vsub.f32 %v700, %v710
  %v713 = vmul.f32 %v711, %v711
  %v714 = vmul.f32 %v712, %v712
  %v715 = vsel %vm162, %v713, 0.0
  %716 = vadd.xlane.f32.xlu0 %v715
  %v717 = vpop.xlane.xlu0 %716
  %v718 = vsel %vm162, %v714, 0.0
  %719 = vadd.xlane.f32.xlu0 %v718
  %v720 = vpop.xlane.xlu0 %719
  %v721 = vmul.f32 %v717, %v169
  %v722 = vmul.f32 %v720, %v169
  %v723 = vadd.f32 %v721, 1e-12
  %v724 = vadd.f32 %v722, 1e-12
  %v725 = vrsqrt.pop %v723
  %v726 = vrsqrt.pop %v724
  %v727 = vmul.f32 %v711, %v725
  %v728 = vmul.f32 %v712, %v726
  %v729 = vlaneseq
  %v730 = vshrl.u32 %v729, 7
  %v731 = vsub.s32 0, %v730
  %v732 = vrot.slane %v701, %v731
  %v733 = vmul.f32 %v727, %v732
  %v734 = vmul.f32 %v728, %v732
  %v735 = vlaneseq
  %v736 = vshrl.u32 %v735, 7
  %v737 = vsub.s32 0, %v736
  %v738 = vrot.slane %v702, %v737
  %v739 = vadd.f32 %v733, %v738
  %v740 = vadd.f32 %v734, %v738
  %v741 = vpack.c.bf16 %v740, %v739
  %v742 = vld [vmem:[%s8] sm:$0xf]
  %v743 = vld [vmem:[%s8 + $0x4] sm:$0xf]
  %v744 = vld [vmem:[%s8 + $0x8] sm:$0xf]
  %v745 = vld [vmem:[%s8 + $0xc] sm:$0xf]
  %v746 = vld [vmem:[%s9 + $0xa] sm:$0x1]
  %v747 = vlaneseq
  %v748 = vshrl.u32 %v747, 7
  %v749 = vsub.s32 0, %v748
  %v750 = vrot.slane %v746, %v749
  %v755 = vunpack.c.l.b16 %v742
  %v756 = vunpack.c.l.b16 %v743
  %v757 = vunpack.c.l.b16 %v744
  %v758 = vunpack.c.l.b16 %v745
  %v759 = vpack.c.b16 %v756, %v755
  %v760 = vpack.c.b16 %v758, %v757
  %v764 = vsel %vm162, %v741, 0
  %766 = vmatprep.subr.bf16.mxu0 0
  %767 = vmatpush1.bf16.msra.mxu0 %v759
  %768 = vmatprep.subr.bf16.mxu0 0
  %769 = vmatpush1.bf16.msra.mxu0 %v760
  %770 = vmatprep.subr.bf16.mxu0 0
  %771 = vmatpush1.bf16.msra.mxu0 0
  %772 = vmatprep.subr.bf16.mxu0 0
  %773 = vmatpush1.bf16.msra.mxu0 0
  %774 = vmatprep.subr.bf16.mxu0 0
  %775 = vmatpush1.bf16.msra.mxu0 0
  %776 = vmatprep.subr.bf16.mxu0 0
  %777 = vmatpush1.bf16.msra.mxu0 0
  %778 = vmatprep.subr.bf16.mxu0 0
  %779 = vmatpush1.bf16.msra.mxu0 0
  %780 = vmatprep.subr.bf16.mxu0 0
  %781 = vmatpush1.bf16.msra.mxu0 0
  %782 = vmatprep.subr.bf16.mxu0 0
  %783 = vmatpush1.bf16.msra.mxu0 0
  %784 = vmatprep.subr.bf16.mxu0 0
  %785 = vmatpush1.bf16.msra.mxu0 0
  %786 = vmatprep.subr.bf16.mxu0 0
  %787 = vmatpush1.bf16.msra.mxu0 0
  %788 = vmatprep.subr.bf16.mxu0 0
  %789 = vmatpush1.bf16.msra.mxu0 0
  %790 = vmatprep.subr.bf16.mxu0 0
  %791 = vmatpush1.bf16.msra.mxu0 0
  %792 = vmatprep.subr.bf16.mxu0 0
  %793 = vmatpush1.bf16.msra.mxu0 0
  %794 = vmatprep.subr.bf16.mxu0 0
  %795 = vmatpush1.bf16.msra.mxu0 0
  %796 = vmatprep.subr.bf16.mxu0 0
  %797 = vmatpush1.bf16.msra.mxu0 0
  %798 = vmatprep.mubr.bf16.mxu0 0
  %799 = vmatmul.mubr.bf16.gmra.mrb[0].mxu0 %v764
  %v800 = vpop.f32.mrb[0].mxu0
  %v801 = vadd.f32 %v750, %v800
  %v802 = vpop.f32.mrb[0].mxu0
  %v803 = vpop.f32.mrb[0].mxu0
  %v804 = vadd.f32 %v750, %v803
  %v805 = vpop.f32.mrb[0].mxu0
  %806 = vdwg.mxu0
  %v807 = vmul.f32 %v801, 0.5
  %v808 = vmul.f32 %v804, 0.5
  %v809 = vmul.f32 %v801, 0.044715
  %v810 = vmul.f32 %v804, 0.044715
  %v811 = vmul.f32 %v809, %v801
  %v812 = vmul.f32 %v810, %v804
  %v813 = vmul.f32 %v811, %v801
  %v814 = vmul.f32 %v812, %v804
  %v815 = vadd.f32 %v801, %v813
  %v816 = vadd.f32 %v804, %v814
  %v817 = vmul.f32 %v815, 0.7978846
  %v818 = vmul.f32 %v816, 0.7978846
  %v819 = vtanh.pop %v817
  %v820 = vtanh.pop %v818
  %v821 = vadd.f32 %v819, 1.0
  %v822 = vadd.f32 %v820, 1.0
  %v823 = vmul.f32 %v807, %v821
  %v824 = vmul.f32 %v808, %v822
  %v825 = vld [vmem:[%s9 + $0xb] sm:$0x1]
  %v826 = vld [vmem:[%s9 + $0xc] sm:$0x1]
  %v827 = vlaneseq
  %v828 = vshrl.u32 %v827, 7
  %v829 = vsub.s32 0, %v828
  %v830 = vrot.slane %v825, %v829
  %v831 = vmul.f32 %v823, %v830
  %v832 = vmul.f32 %v824, %v830
  %v833 = vsel %vm162, %v831, 0.0
  %834 = vadd.xlane.f32.xlu0 %v833
  %v835 = vpop.xlane.xlu0 %834
  %v836 = vsel %vm162, %v832, 0.0
  %837 = vadd.xlane.f32.xlu0 %v836
  %v838 = vpop.xlane.xlu0 %837
  %v839 = vlaneseq
  %v840 = vshrl.u32 %v839, 7
  %v841 = vsub.s32 0, %v840
  %v842 = vrot.slane %v826, %v841
  %v843 = vadd.f32 %v835, %v842
  %v844 = vadd.f32 %v838, %v842
  %vm845 = vcmask 7168
  %846 = vst.msk [vmem:[%s10] sm:$0xff] %vm845, %v843
  %847 = vst.msk [vmem:[%s10 + $0x8] sm:$0xff] %vm845, %v844
  // Predicated region
  $region42: #{electra_forward.3} parent=0 // pred_check
    _
  $region43: #{electra_forward.3} parent=0 // pred_check_branch
    %849 = sbr.rel (0) target = $region45
  $region44: #{electra_forward.3} parent=0 // pred_region
    _
  $region45: #{electra_forward.3} parent=0 // pred_fallthru
    _
  // Predicated region
  $region46: #{electra_forward.3} parent=0 // pred_check
    _
  $region47: #{electra_forward.3} parent=0 // pred_check_branch
    %851 = sbr.rel (0) target = $region49
  $region48: #{electra_forward.3} parent=0 // pred_region
    _
  $region49: #{electra_forward.3} parent=0 // pred_fallthru
    _

// kernel: electra_forward.2
$region0: #{electra_forward.2}
  #allocation0 [shape = 'u32[]', space=smem, size = 0x4, offset = 0x4, fixed_abs, tag = 'smem constant byte address 0x4 - core index']
  #allocation1 [shape = 'u32[144,128]{1,0:T(1,128)}', space=vmem, size = 0x12000, scoped, tag = 'internal scratch']
  %s0 = inlined_call_operand.vmem [shape: s32[16,1], index: 0, kind: input, shape index: {}]
  %s1 = inlined_call_operand.vmem [shape: f32[16,32], index: 1, kind: input, shape index: {}]
  %s2 = inlined_call_operand.vmem [shape: f32[16,16], index: 2, kind: input, shape index: {}]
  %s3 = inlined_call_operand.vmem [shape: bf16[6,16], index: 3, kind: input, shape index: {}]
  %s4 = inlined_call_operand.vmem [shape: f32[6,128], index: 4, kind: input, shape index: {}]
  %s5 = inlined_call_operand.vmem [shape: bf16[128,32], index: 5, kind: input, shape index: {}]
  %s6 = inlined_call_operand.vmem [shape: bf16[32,96], index: 6, kind: input, shape index: {}]
  %s7 = inlined_call_operand.vmem [shape: bf16[32,32], index: 7, kind: input, shape index: {}]
  %s8 = inlined_call_operand.vmem [shape: bf16[32,128], index: 8, kind: input, shape index: {}]
  %s9 = inlined_call_operand.vmem [shape: bf16[128,32], index: 9, kind: input, shape index: {}]
  %s10 = inlined_call_operand.vmem [shape: bf16[32,32], index: 10, kind: input, shape index: {}]
  %s11 = inlined_call_operand.vmem [shape: bf16[32,128], index: 11, kind: input, shape index: {}]
  %s12 = inlined_call_operand.vmem [shape: f32[14,128], index: 12, kind: input, shape index: {}]
  %s13 = inlined_call_operand.hbm [shape: f32[6,128], index: 13, kind: output, shape index: {0}]
  %s14 = inlined_call_operand.vmem [shape: s32[6,1], index: 14, kind: output, shape index: {1}]
  %15 = xla_tuple %s13, %s14
  %s16 = sld [smem:[#allocation0]]
  $region70: #{electra_forward.2} parent=0
    _
  %s18 = ssub.s32 1, %s16
  %s19 = scalar_select 0, %s18, %s16
  $region1: #{electra_forward.2} parent=0
    #allocation2 [shape = 'u8[4096]{0}', space=vmem, size = 0x1000, scoped, tag = 'output window, operand 0, single buffered']
    #allocation3 [shape = 's32[1]{0}', space=sflag, size = 0x4, scoped, tag = 'scoped memory for electra_forward.2']
    %20 = vsyncpa [#allocation3], 0
    // Predicated region
    $region2: #{electra_forward.2} parent=1 // pred_check
      _
    $region3: #{electra_forward.2} parent=1 // pred_check_branch
      %22 = sbr.rel (0) target = $region5
    $region4: #{electra_forward.2} parent=1 // pred_region
      _
    $region5: #{electra_forward.2} parent=1 // pred_fallthru
      _
    // Predicated region
    $region6: #{electra_forward.2} parent=1 // pred_check
      _
    $region7: #{electra_forward.2} parent=1 // pred_check_branch
      %24 = sbr.rel (0) target = $region9
    $region8: #{electra_forward.2} parent=1 // pred_region
      _
    $region9: #{electra_forward.2} parent=1 // pred_fallthru
      _
    // Predicated region
    $region10: #{electra_forward.2} parent=1 // pred_check
      _
    $region11: #{electra_forward.2} parent=1 // pred_check_branch
      %26 = sbr.rel (0) target = $region13
    $region12: #{electra_forward.2} parent=1 // pred_region
      _
    $region13: #{electra_forward.2} parent=1 // pred_fallthru
      _
    // Predicated region
    $region14: #{electra_forward.2} parent=1 // pred_check
      _
    $region15: #{electra_forward.2} parent=1 // pred_check_branch
      %28 = sbr.rel (0) target = $region17
    $region16: #{electra_forward.2} parent=1 // pred_region
      _
    $region17: #{electra_forward.2} parent=1 // pred_fallthru
      _
    // Predicated region
    $region18: #{electra_forward.2} parent=1 // pred_check
      _
    $region19: #{electra_forward.2} parent=1 // pred_check_branch
      %30 = sbr.rel (0) target = $region21
    $region20: #{electra_forward.2} parent=1 // pred_region
      _
    $region21: #{electra_forward.2} parent=1 // pred_fallthru
      _
    // Predicated region
    $region22: #{electra_forward.2} parent=1 // pred_check
      _
    $region23: #{electra_forward.2} parent=1 // pred_check_branch
      %32 = sbr.rel (0) target = $region25
    $region24: #{electra_forward.2} parent=1 // pred_region
      _
    $region25: #{electra_forward.2} parent=1 // pred_fallthru
      _
    // Predicated region
    $region26: #{electra_forward.2} parent=1 // pred_check
      _
    $region27: #{electra_forward.2} parent=1 // pred_check_branch
      %34 = sbr.rel (0) target = $region29
    $region28: #{electra_forward.2} parent=1 // pred_region
      _
    $region29: #{electra_forward.2} parent=1 // pred_fallthru
      _
    // Predicated region
    $region30: #{electra_forward.2} parent=1 // pred_check
      _
    $region31: #{electra_forward.2} parent=1 // pred_check_branch
      %36 = sbr.rel (0) target = $region33
    $region32: #{electra_forward.2} parent=1 // pred_region
      _
    $region33: #{electra_forward.2} parent=1 // pred_fallthru
      _
    // Predicated region
    $region34: #{electra_forward.2} parent=1 // pred_check
      _
    $region35: #{electra_forward.2} parent=1 // pred_check_branch
      %38 = sbr.rel (0) target = $region37
    $region36: #{electra_forward.2} parent=1 // pred_region
      _
    $region37: #{electra_forward.2} parent=1 // pred_fallthru
      _
    // Predicated region
    $region38: #{electra_forward.2} parent=1 // pred_check
      _
    $region39: #{electra_forward.2} parent=1 // pred_check_branch
      %40 = sbr.rel (0) target = $region41
    $region40: #{electra_forward.2} parent=1 // pred_region
      _
    $region41: #{electra_forward.2} parent=1 // pred_fallthru
      _
    // Predicated region
    $region42: #{electra_forward.2} parent=1 // pred_check
      _
    $region43: #{electra_forward.2} parent=1 // pred_check_branch
      %42 = sbr.rel (0) target = $region45
    $region44: #{electra_forward.2} parent=1 // pred_region
      _
    $region45: #{electra_forward.2} parent=1 // pred_fallthru
      _
    // Predicated region
    $region46: #{electra_forward.2} parent=1 // pred_check
      _
    $region47: #{electra_forward.2} parent=1 // pred_check_branch
      %44 = sbr.rel (0) target = $region49
    $region48: #{electra_forward.2} parent=1 // pred_region
      _
    $region49: #{electra_forward.2} parent=1 // pred_fallthru
      _
    // Predicated region
    $region50: #{electra_forward.2} parent=1 // pred_check
      _
    $region51: #{electra_forward.2} parent=1 // pred_check_branch
      %46 = sbr.rel (0) target = $region53
    $region52: #{electra_forward.2} parent=1 // pred_region
      _
    $region53: #{electra_forward.2} parent=1 // pred_fallthru
      _
    %v48 = vld [vmem:[%s0] sm:$0xff]
    %v49 = vld [vmem:[%s0 + $0x8] sm:$0xff]
    %v50 = vlaneseq
    %v51 = vand.u32 %v50, 127
    %52 = vset.pattern.permute.xlu0 0
    %53 = vperm.xlu0 %52, %v48
    %v54 = vpop.permute.xlu0 %53
    %55 = vset.pattern.permute.xlu0 0
    %56 = vperm.xlu0 %55, %v49
    %v57 = vpop.permute.xlu0 %56
    %vm58 = vcmp.eq.s32.totalorder %v51, %v54
    %vm59 = vcmp.eq.s32.totalorder %v51, %v57
    %v60 = vsel %vm58, 1, 0
    %v61 = vsel %vm59, 1, 0
    %v62 = vcvt.s32.f32 %v60
    %v63 = vcvt.s32.f32 %v61
    %v64 = vpack.c.bf16 %v63, %v62
    %v65 = vld [vmem:[%s5] sm:$0xf]
    %v66 = vld [vmem:[%s5 + $0x4] sm:$0xf]
    %v67 = vld [vmem:[%s5 + $0x8] sm:$0xf]
    %v68 = vld [vmem:[%s5 + $0xc] sm:$0xf]
    %v69 = vld [vmem:[%s5 + $0x10] sm:$0xf]
    %v70 = vld [vmem:[%s5 + $0x14] sm:$0xf]
    %v71 = vld [vmem:[%s5 + $0x18] sm:$0xf]
    %v72 = vld [vmem:[%s5 + $0x1c] sm:$0xf]
    %v73 = vld [vmem:[%s5 + $0x20] sm:$0xf]
    %v74 = vld [vmem:[%s5 + $0x24] sm:$0xf]
    %v75 = vld [vmem:[%s5 + $0x28] sm:$0xf]
    %v76 = vld [vmem:[%s5 + $0x2c] sm:$0xf]
    %v77 = vld [vmem:[%s5 + $0x30] sm:$0xf]
    %v78 = vld [vmem:[%s5 + $0x34] sm:$0xf]
    %v79 = vld [vmem:[%s5 + $0x38] sm:$0xf]
    %v80 = vld [vmem:[%s5 + $0x3c] sm:$0xf]
    %v81 = vld [vmem:[%s1] sm:$0xff]
    %v82 = vld [vmem:[%s1 + $0x8] sm:$0xff]
    %v99 = vunpack.c.l.b16 %v65
    %v100 = vunpack.c.l.b16 %v66
    %v101 = vunpack.c.l.b16 %v67
    %v102 = vunpack.c.l.b16 %v68
    %v103 = vunpack.c.l.b16 %v69
    %v104 = vunpack.c.l.b16 %v70
    %v105 = vunpack.c.l.b16 %v71
    %v106 = vunpack.c.l.b16 %v72
    %v107 = vunpack.c.l.b16 %v73
    %v108 = vunpack.c.l.b16 %v74
    %v109 = vunpack.c.l.b16 %v75
    %v110 = vunpack.c.l.b16 %v76
    %v111 = vunpack.c.l.b16 %v77
    %v112 = vunpack.c.l.b16 %v78
    %v113 = vunpack.c.l.b16 %v79
    %v114 = vunpack.c.l.b16 %v80
    %v115 = vpack.c.b16 %v100, %v99
    %v116 = vpack.c.b16 %v102, %v101
    %v117 = vpack.c.b16 %v104, %v103
    %v118 = vpack.c.b16 %v106, %v105
    %v119 = vpack.c.b16 %v108, %v107
    %v120 = vpack.c.b16 %v110, %v109
    %v121 = vpack.c.b16 %v112, %v111
    %v122 = vpack.c.b16 %v114, %v113
    %131 = vmatprep.subr.bf16.mxu0 0
    %132 = vmatpush1.bf16.msra.mxu0 %v115
    %133 = vmatprep.subr.bf16.mxu0 0
    %134 = vmatpush1.bf16.msra.mxu0 %v116
    %135 = vmatprep.subr.bf16.mxu0 0
    %136 = vmatpush1.bf16.msra.mxu0 %v117
    %137 = vmatprep.subr.bf16.mxu0 0
    %138 = vmatpush1.bf16.msra.mxu0 %v118
    %139 = vmatprep.subr.bf16.mxu0 0
    %140 = vmatpush1.bf16.msra.mxu0 %v119
    %141 = vmatprep.subr.bf16.mxu0 0
    %142 = vmatpush1.bf16.msra.mxu0 %v120
    %143 = vmatprep.subr.bf16.mxu0 0
    %144 = vmatpush1.bf16.msra.mxu0 %v121
    %145 = vmatprep.subr.bf16.mxu0 0
    %146 = vmatpush1.bf16.msra.mxu0 %v122
    %147 = vmatprep.subr.bf16.mxu0 0
    %148 = vmatpush1.bf16.msra.mxu0 0
    %149 = vmatprep.subr.bf16.mxu0 0
    %150 = vmatpush1.bf16.msra.mxu0 0
    %151 = vmatprep.subr.bf16.mxu0 0
    %152 = vmatpush1.bf16.msra.mxu0 0
    %153 = vmatprep.subr.bf16.mxu0 0
    %154 = vmatpush1.bf16.msra.mxu0 0
    %155 = vmatprep.subr.bf16.mxu0 0
    %156 = vmatpush1.bf16.msra.mxu0 0
    %157 = vmatprep.subr.bf16.mxu0 0
    %158 = vmatpush1.bf16.msra.mxu0 0
    %159 = vmatprep.subr.bf16.mxu0 0
    %160 = vmatpush1.bf16.msra.mxu0 0
    %161 = vmatprep.subr.bf16.mxu0 0
    %162 = vmatpush1.bf16.msra.mxu0 0
    %163 = vmatprep.mubr.bf16.mxu0 0
    %164 = vmatmul.mubr.bf16.gmra.mrb[0].mxu0 %v64
    %v165 = vpop.f32.mrb[0].mxu0
    %v166 = vadd.f32 %v81, %v165
    %v167 = vpop.f32.mrb[0].mxu0
    %v168 = vpop.f32.mrb[0].mxu0
    %v169 = vadd.f32 %v82, %v168
    %v170 = vpop.f32.mrb[0].mxu0
    %171 = vdwg.mxu0
    %v172 = vld [vmem:[%s12] sm:$0x1]
    %v173 = vld [vmem:[%s12 + $0x1] sm:$0x1]
    %vm174 = vcmask 261120
    %v175 = vsel %vm174, %v166, 0.0
    %176 = vadd.xlane.f32.xlu0 %v175
    %v177 = vpop.xlane.xlu0 %176
    %v178 = vsel %vm174, %v169, 0.0
    %179 = vadd.xlane.f32.xlu0 %v178
    %v180 = vpop.xlane.xlu0 %179
    %v181 = vrcp.pop 32.0
    %v182 = vmul.f32 %v177, %v181
    %v183 = vmul.f32 %v180, %v181
    %v184 = vsub.f32 %v166, %v182
    %v185 = vsub.f32 %v169, %v183
    %v186 = vmul.f32 %v184, %v184
    %v187 = vmul.f32 %v185, %v185
    %v188 = vsel %vm174, %v186, 0.0
    %189 = vadd.xlane.f32.xlu0 %v188
    %v190 = vpop.xlane.xlu0 %189
    %v191 = vsel %vm174, %v187, 0.0
    %192 = vadd.xlane.f32.xlu0 %v191
    %v193 = vpop.xlane.xlu0 %192
    %v194 = vmul.f32 %v190, %v181
    %v195 = vmul.f32 %v193, %v181
    %v196 = vadd.f32 %v194, 1e-12
    %v197 = vadd.f32 %v195, 1e-12
    %v198 = vrsqrt.pop %v196
    %v199 = vrsqrt.pop %v197
    %v200 = vmul.f32 %v184, %v198
    %v201 = vmul.f32 %v185, %v199
    %v202 = vlaneseq
    %v203 = vshrl.u32 %v202, 7
    %v204 = vsub.s32 0, %v203
    %v205 = vrot.slane %v172, %v204
    %v206 = vmul.f32 %v200, %v205
    %v207 = vmul.f32 %v201, %v205
    %v208 = vlaneseq
    %v209 = vshrl.u32 %v208, 7
    %v210 = vsub.s32 0, %v209
    %v211 = vrot.slane %v173, %v210
    %v212 = vadd.f32 %v206, %v211
    %v213 = vadd.f32 %v207, %v211
    %v214 = vpack.c.bf16 %v213, %v212
    %v215 = vld [vmem:[%s6] sm:$0xf]
    %v216 = vld [vmem:[%s6 + $0x4] sm:$0xf]
    %v217 = vld [vmem:[%s6 + $0x8] sm:$0xf]
    %v218 = vld [vmem:[%s6 + $0xc] sm:$0xf]
    %v219 = vld [vmem:[%s12 + $0x2] sm:$0x1]
    %v220 = vlaneseq
    %v221 = vshrl.u32 %v220, 7
    %v222 = vsub.s32 0, %v221
    %v223 = vrot.slane %v219, %v222
    %v228 = vunpack.c.l.b16 %v215
    %v229 = vunpack.c.l.b16 %v216
    %v230 = vunpack.c.l.b16 %v217
    %v231 = vunpack.c.l.b16 %v218
    %v232 = vpack.c.b16 %v229, %v228
    %v233 = vpack.c.b16 %v231, %v230
    %v237 = vsel %vm174, %v214, 0
    %239 = vmatprep.subr.bf16.mxu0 0
    %240 = vmatpush1.bf16.msra.mxu0 %v232
    %241 = vmatprep.subr.bf16.mxu0 0
    %242 = vmatpush1.bf16.msra.mxu0 %v233
    %243 = vmatprep.subr.bf16.mxu0 0
    %244 = vmatpush1.bf16.msra.mxu0 0
    %245 = vmatprep.subr.bf16.mxu0 0
    %246 = vmatpush1.bf16.msra.mxu0 0
    %247 = vmatprep.subr.bf16.mxu0 0
    %248 = vmatpush1.bf16.msra.mxu0 0
    %249 = vmatprep.subr.bf16.mxu0 0
    %250 = vmatpush1.bf16.msra.mxu0 0
    %251 = vmatprep.subr.bf16.mxu0 0
    %252 = vmatpush1.bf16.msra.mxu0 0
    %253 = vmatprep.subr.bf16.mxu0 0
    %254 = vmatpush1.bf16.msra.mxu0 0
    %255 = vmatprep.subr.bf16.mxu0 0
    %256 = vmatpush1.bf16.msra.mxu0 0
    %257 = vmatprep.subr.bf16.mxu0 0
    %258 = vmatpush1.bf16.msra.mxu0 0
    %259 = vmatprep.subr.bf16.mxu0 0
    %260 = vmatpush1.bf16.msra.mxu0 0
    %261 = vmatprep.subr.bf16.mxu0 0
    %262 = vmatpush1.bf16.msra.mxu0 0
    %263 = vmatprep.subr.bf16.mxu0 0
    %264 = vmatpush1.bf16.msra.mxu0 0
    %265 = vmatprep.subr.bf16.mxu0 0
    %266 = vmatpush1.bf16.msra.mxu0 0
    %267 = vmatprep.subr.bf16.mxu0 0
    %268 = vmatpush1.bf16.msra.mxu0 0
    %269 = vmatprep.subr.bf16.mxu0 0
    %270 = vmatpush1.bf16.msra.mxu0 0
    %271 = vmatprep.mubr.bf16.mxu0 0
    %272 = vmatmul.mubr.bf16.gmra.mrb[0].mxu0 %v237
    %v273 = vpop.f32.mrb[0].mxu0
    %v274 = vadd.f32 %v223, %v273
    %v275 = vpop.f32.mrb[0].mxu0
    %v276 = vpop.f32.mrb[0].mxu0
    %v277 = vadd.f32 %v223, %v276
    %v278 = vpop.f32.mrb[0].mxu0
    %279 = vdwg.mxu0
    %v280 = vpack.c.bf16 %v277, %v274
    %282 = vrot.lane.b32.xlu0 %v280, 96
    %v283 = vpop.permute.xlu0 %282
    %v285 = vsel %vm174, %v280, 0
    %v288 = vsel %vm174, %v283, 0
    %290 = vmatprep.subr.bf16.mxu0 0
    %291 = vmatpush1.bf16.xpose.msra.mxu0 %v288
    %292 = vmatprep.subr.bf16.mxu0 0
    %293 = vmatpush1.bf16.xpose.msra.mxu0 0
    %294 = vmatprep.subr.bf16.mxu0 0
    %295 = vmatpush1.bf16.xpose.msra.mxu0 0
    %296 = vmatprep.subr.bf16.mxu0 0
    %297 = vmatpush1.bf16.xpose.msra.mxu0 0
    %298 = vmatprep.subr.bf16.mxu0 0
    %299 = vmatpush1.bf16.xpose.msra.mxu0 0
    %300 = vmatprep.subr.bf16.mxu0 0
    %301 = vmatpush1.bf16.xpose.msra.mxu0 0
    %302 = vmatprep.subr.bf16.mxu0 0
    %303 = vmatpush1.bf16.xpose.msra.mxu0 0
    %304 = vmatprep.subr.bf16.mxu0 0
    %305 = vmatpush1.bf16.xpose.msra.mxu0 0
    %306 = vmatprep.subr.bf16.mxu0 0
    %307 = vmatpush1.bf16.xpose.msra.mxu0 0
    %308 = vmatprep.subr.bf16.mxu0 0
    %309 = vmatpush1.bf16.xpose.msra.mxu0 0
    %310 = vmatprep.subr.bf16.mxu0 0
    %311 = vmatpush1.bf16.xpose.msra.mxu0 0
    %312 = vmatprep.subr.bf16.mxu0 0
    %313 = vmatpush1.bf16.xpose.msra.mxu0 0
    %314 = vmatprep.subr.bf16.mxu0 0
    %315 = vmatpush1.bf16.xpose.msra.mxu0 0
    %316 = vmatprep.subr.bf16.mxu0 0
    %317 = vmatpush1.bf16.xpose.msra.mxu0 0
    %318 = vmatprep.subr.bf16.mxu0 0
    %319 = vmatpush1.bf16.xpose.msra.mxu0 0
    %320 = vmatprep.subr.bf16.mxu0 0
    %321 = vmatpush1.bf16.xpose.msra.mxu0 0
    %322 = vmatprep.mubr.bf16.mxu0 0
    %323 = vmatmul.mubr.bf16.gmra.mrb[0].mxu0 %v285
    %v324 = vpop.f32.mrb[0].mxu0
    %v325 = vadd.f32 0.0, %v324
    %v326 = vpop.f32.mrb[0].mxu0
    %v327 = vpop.f32.mrb[0].mxu0
    %v328 = vadd.f32 0.0, %v327
    %v329 = vpop.f32.mrb[0].mxu0
    %330 = vdwg.mxu0
    %v331 = vmul.f32 %v325, 0.17677669
    %v332 = vmul.f32 %v328, 0.17677669
    %v333 = vld [vmem:[%s2] sm:$0xff]
    %v334 = vld [vmem:[%s2 + $0x8] sm:$0xff]
    %v335 = vadd.f32 %v331, %v333
    %v336 = vadd.f32 %v332, %v334
    %vm337 = vcmask 130048
    %v338 = vsel %vm337, %v335, -inf
    %339 = vmax.xlane.f32.xlu0 %v338
    %v340 = vpop.xlane.xlu0 %339
    %v341 = vsel %vm337, %v336, -inf
    %342 = vmax.xlane.f32.xlu0 %v341
    %v343 = vpop.xlane.xlu0 %342
    %v344 = vsub.f32 %v335, %v340
    %v345 = vsub.f32 %v336, %v343
    %v346 = vmul.f32 %v344, 1.442695
    %v347 = vpow.pop %v346
    %v348 = vmul.f32 %v345, 1.442695
    %v349 = vpow.pop %v348
    %v350 = vsel %vm337, %v347, 0.0
    %351 = vadd.xlane.f32.xlu0 %v350
    %v352 = vpop.xlane.xlu0 %351
    %v353 = vsel %vm337, %v349, 0.0
    %354 = vadd.xlane.f32.xlu0 %v353
    %v355 = vpop.xlane.xlu0 %354
    %v356 = vrcp.pop %v352
    %v357 = vrcp.pop %v355
    %v358 = vmul.f32 %v347, %v356
    %v359 = vmul.f32 %v349, %v357
    %v360 = vpack.c.bf16 %v359, %v358
    %361 = vrot.lane.b32.xlu0 %v280, 64
    %v362 = vpop.permute.xlu0 %361
    %v365 = vsel %vm337, %v360, 0
    %367 = vmatprep.subr.bf16.mxu0 0
    %368 = vmatpush1.bf16.msra.mxu0 %v362
    %369 = vmatprep.subr.bf16.mxu0 0
    %370 = vmatpush1.bf16.msra.mxu0 0
    %371 = vmatprep.subr.bf16.mxu0 0
    %372 = vmatpush1.bf16.msra.mxu0 0
    %373 = vmatprep.subr.bf16.mxu0 0
    %374 = vmatpush1.bf16.msra.mxu0 0
    %375 = vmatprep.subr.bf16.mxu0 0
    %376 = vmatpush1.bf16.msra.mxu0 0
    %377 = vmatprep.subr.bf16.mxu0 0
    %378 = vmatpush1.bf16.msra.mxu0 0
    %379 = vmatprep.subr.bf16.mxu0 0
    %380 = vmatpush1.bf16.msra.mxu0 0
    %381 = vmatprep.subr.bf16.mxu0 0
    %382 = vmatpush1.bf16.msra.mxu0 0
    %383 = vmatprep.subr.bf16.mxu0 0
    %384 = vmatpush1.bf16.msra.mxu0 0
    %385 = vmatprep.subr.bf16.mxu0 0
    %386 = vmatpush1.bf16.msra.mxu0 0
    %387 = vmatprep.subr.bf16.mxu0 0
    %388 = vmatpush1.bf16.msra.mxu0 0
    %389 = vmatprep.subr.bf16.mxu0 0
    %390 = vmatpush1.bf16.msra.mxu0 0
    %391 = vmatprep.subr.bf16.mxu0 0
    %392 = vmatpush1.bf16.msra.mxu0 0
    %393 = vmatprep.subr.bf16.mxu0 0
    %394 = vmatpush1.bf16.msra.mxu0 0
    %395 = vmatprep.subr.bf16.mxu0 0
    %396 = vmatpush1.bf16.msra.mxu0 0
    %397 = vmatprep.subr.bf16.mxu0 0
    %398 = vmatpush1.bf16.msra.mxu0 0
    %399 = vmatprep.mubr.bf16.mxu0 0
    %400 = vmatmul.mubr.bf16.gmra.mrb[0].mxu0 %v365
    %v401 = vpop.f32.mrb[0].mxu0
    %v402 = vadd.f32 0.0, %v401
    %v403 = vpop.f32.mrb[0].mxu0
    %v404 = vpop.f32.mrb[0].mxu0
    %v405 = vadd.f32 0.0, %v404
    %v406 = vpop.f32.mrb[0].mxu0
    %407 = vdwg.mxu0
    %v408 = vpack.c.bf16 %v405, %v402
    %v409 = vld [vmem:[%s7] sm:$0xf]
    %v410 = vld [vmem:[%s7 + $0x4] sm:$0xf]
    %v411 = vld [vmem:[%s7 + $0x8] sm:$0xf]
    %v412 = vld [vmem:[%s7 + $0xc] sm:$0xf]
    %v413 = vld [vmem:[%s12 + $0x3] sm:$0x1]
    %v414 = vlaneseq
    %v415 = vshrl.u32 %v414, 7
    %v416 = vsub.s32 0, %v415
    %v417 = vrot.slane %v413, %v416
    %v422 = vunpack.c.l.b16 %v409
    %v423 = vunpack.c.l.b16 %v410
    %v424 = vunpack.c.l.b16 %v411
    %v425 = vunpack.c.l.b16 %v412
    %v426 = vpack.c.b16 %v423, %v422
    %v427 = vpack.c.b16 %v425, %v424
    %v431 = vsel %vm174, %v408, 0
    %433 = vmatprep.subr.bf16.mxu0 0
    %434 = vmatpush1.bf16.msra.mxu0 %v426
    %435 = vmatprep.subr.bf16.mxu0 0
    %436 = vmatpush1.bf16.msra.mxu0 %v427
    %437 = vmatprep.subr.bf16.mxu0 0
    %438 = vmatpush1.bf16.msra.mxu0 0
    %439 = vmatprep.subr.bf16.mxu0 0
    %440 = vmatpush1.bf16.msra.mxu0 0
    %441 = vmatprep.subr.bf16.mxu0 0
    %442 = vmatpush1.bf16.msra.mxu0 0
    %443 = vmatprep.subr.bf16.mxu0 0
    %444 = vmatpush1.bf16.msra.mxu0 0
    %445 = vmatprep.subr.bf16.mxu0 0
    %446 = vmatpush1.bf16.msra.mxu0 0
    %447 = vmatprep.subr.bf16.mxu0 0
    %448 = vmatpush1.bf16.msra.mxu0 0
    %449 = vmatprep.subr.bf16.mxu0 0
    %450 = vmatpush1.bf16.msra.mxu0 0
    %451 = vmatprep.subr.bf16.mxu0 0
    %452 = vmatpush1.bf16.msra.mxu0 0
    %453 = vmatprep.subr.bf16.mxu0 0
    %454 = vmatpush1.bf16.msra.mxu0 0
    %455 = vmatprep.subr.bf16.mxu0 0
    %456 = vmatpush1.bf16.msra.mxu0 0
    %457 = vmatprep.subr.bf16.mxu0 0
    %458 = vmatpush1.bf16.msra.mxu0 0
    %459 = vmatprep.subr.bf16.mxu0 0
    %460 = vmatpush1.bf16.msra.mxu0 0
    %461 = vmatprep.subr.bf16.mxu0 0
    %462 = vmatpush1.bf16.msra.mxu0 0
    %463 = vmatprep.subr.bf16.mxu0 0
    %464 = vmatpush1.bf16.msra.mxu0 0
    %465 = vmatprep.mubr.bf16.mxu0 0
    %466 = vmatmul.mubr.bf16.gmra.mrb[0].mxu0 %v431
    %v467 = vpop.f32.mrb[0].mxu0
    %v468 = vadd.f32 %v417, %v467
    %v469 = vpop.f32.mrb[0].mxu0
    %v470 = vpop.f32.mrb[0].mxu0
    %v471 = vadd.f32 %v417, %v470
    %v472 = vpop.f32.mrb[0].mxu0
    %473 = vdwg.mxu0
    %v474 = vadd.f32 %v212, %v468
    %v475 = vadd.f32 %v213, %v471
    %v476 = vld [vmem:[%s12 + $0x4] sm:$0x1]
    %v477 = vld [vmem:[%s12 + $0x5] sm:$0x1]
    %v478 = vsel %vm174, %v474, 0.0
    %479 = vadd.xlane.f32.xlu0 %v478
    %v480 = vpop.xlane.xlu0 %479
    %v481 = vsel %vm174, %v475, 0.0
    %482 = vadd.xlane.f32.xlu0 %v481
    %v483 = vpop.xlane.xlu0 %482
    %v484 = vmul.f32 %v480, %v181
    %v485 = vmul.f32 %v483, %v181
    %v486 = vsub.f32 %v474, %v484
    %v487 = vsub.f32 %v475, %v485
    %v488 = vmul.f32 %v486, %v486
    %v489 = vmul.f32 %v487, %v487
    %v490 = vsel %vm174, %v488, 0.0
    %491 = vadd.xlane.f32.xlu0 %v490
    %v492 = vpop.xlane.xlu0 %491
    %v493 = vsel %vm174, %v489, 0.0
    %494 = vadd.xlane.f32.xlu0 %v493
    %v495 = vpop.xlane.xlu0 %494
    %v496 = vmul.f32 %v492, %v181
    %v497 = vmul.f32 %v495, %v181
    %v498 = vadd.f32 %v496, 1e-12
    %v499 = vadd.f32 %v497, 1e-12
    %v500 = vrsqrt.pop %v498
    %v501 = vrsqrt.pop %v499
    %v502 = vmul.f32 %v486, %v500
    %v503 = vmul.f32 %v487, %v501
    %v504 = vlaneseq
    %v505 = vshrl.u32 %v504, 7
    %v506 = vsub.s32 0, %v505
    %v507 = vrot.slane %v476, %v506
    %v508 = vmul.f32 %v502, %v507
    %v509 = vmul.f32 %v503, %v507
    %v510 = vlaneseq
    %v511 = vshrl.u32 %v510, 7
    %v512 = vsub.s32 0, %v511
    %v513 = vrot.slane %v477, %v512
    %v514 = vadd.f32 %v508, %v513
    %v515 = vadd.f32 %v509, %v513
    %v516 = vpack.c.bf16 %v515, %v514
    %v517 = vld [vmem:[%s8] sm:$0xf]
    %v518 = vld [vmem:[%s8 + $0x4] sm:$0xf]
    %v519 = vld [vmem:[%s8 + $0x8] sm:$0xf]
    %v520 = vld [vmem:[%s8 + $0xc] sm:$0xf]
    %v521 = vld [vmem:[%s12 + $0x6] sm:$0x1]
    %v522 = vlaneseq
    %v523 = vshrl.u32 %v522, 7
    %v524 = vsub.s32 0, %v523
    %v525 = vrot.slane %v521, %v524
    %v530 = vunpack.c.l.b16 %v517
    %v531 = vunpack.c.l.b16 %v518
    %v532 = vunpack.c.l.b16 %v519
    %v533 = vunpack.c.l.b16 %v520
    %v534 = vpack.c.b16 %v531, %v530
    %v535 = vpack.c.b16 %v533, %v532
    %v539 = vsel %vm174, %v516, 0
    %541 = vmatprep.subr.bf16.mxu0 0
    %542 = vmatpush1.bf16.msra.mxu0 %v534
    %543 = vmatprep.subr.bf16.mxu0 0
    %544 = vmatpush1.bf16.msra.mxu0 %v535
    %545 = vmatprep.subr.bf16.mxu0 0
    %546 = vmatpush1.bf16.msra.mxu0 0
    %547 = vmatprep.subr.bf16.mxu0 0
    %548 = vmatpush1.bf16.msra.mxu0 0
    %549 = vmatprep.subr.bf16.mxu0 0
    %550 = vmatpush1.bf16.msra.mxu0 0
    %551 = vmatprep.subr.bf16.mxu0 0
    %552 = vmatpush1.bf16.msra.mxu0 0
    %553 = vmatprep.subr.bf16.mxu0 0
    %554 = vmatpush1.bf16.msra.mxu0 0
    %555 = vmatprep.subr.bf16.mxu0 0
    %556 = vmatpush1.bf16.msra.mxu0 0
    %557 = vmatprep.subr.bf16.mxu0 0
    %558 = vmatpush1.bf16.msra.mxu0 0
    %559 = vmatprep.subr.bf16.mxu0 0
    %560 = vmatpush1.bf16.msra.mxu0 0
    %561 = vmatprep.subr.bf16.mxu0 0
    %562 = vmatpush1.bf16.msra.mxu0 0
    %563 = vmatprep.subr.bf16.mxu0 0
    %564 = vmatpush1.bf16.msra.mxu0 0
    %565 = vmatprep.subr.bf16.mxu0 0
    %566 = vmatpush1.bf16.msra.mxu0 0
    %567 = vmatprep.subr.bf16.mxu0 0
    %568 = vmatpush1.bf16.msra.mxu0 0
    %569 = vmatprep.subr.bf16.mxu0 0
    %570 = vmatpush1.bf16.msra.mxu0 0
    %571 = vmatprep.subr.bf16.mxu0 0
    %572 = vmatpush1.bf16.msra.mxu0 0
    %573 = vmatprep.mubr.bf16.mxu0 0
    %574 = vmatmul.mubr.bf16.gmra.mrb[0].mxu0 %v539
    %v575 = vpop.f32.mrb[0].mxu0
    %v576 = vadd.f32 %v525, %v575
    %v577 = vpop.f32.mrb[0].mxu0
    %v578 = vpop.f32.mrb[0].mxu0
    %v579 = vadd.f32 %v525, %v578
    %v580 = vpop.f32.mrb[0].mxu0
    %581 = vdwg.mxu0
    %v582 = vmul.f32 %v576, 0.5
    %v583 = vmul.f32 %v579, 0.5
    %v584 = vmul.f32 %v576, 0.044715
    %v585 = vmul.f32 %v579, 0.044715
    %v586 = vmul.f32 %v584, %v576
    %v587 = vmul.f32 %v585, %v579
    %v588 = vmul.f32 %v586, %v576
    %v589 = vmul.f32 %v587, %v579
    %v590 = vadd.f32 %v576, %v588
    %v591 = vadd.f32 %v579, %v589
    %v592 = vmul.f32 %v590, 0.7978846
    %v593 = vmul.f32 %v591, 0.7978846
    %v594 = vtanh.pop %v592
    %v595 = vtanh.pop %v593
    %v596 = vadd.f32 %v594, 1.0
    %v597 = vadd.f32 %v595, 1.0
    %v598 = vmul.f32 %v582, %v596
    %v599 = vmul.f32 %v583, %v597
    %v600 = vpack.c.bf16 %v599, %v598
    %v601 = vld [vmem:[%s9] sm:$0xf]
    %v602 = vld [vmem:[%s9 + $0x4] sm:$0xf]
    %v603 = vld [vmem:[%s9 + $0x8] sm:$0xf]
    %v604 = vld [vmem:[%s9 + $0xc] sm:$0xf]
    %v605 = vld [vmem:[%s9 + $0x10] sm:$0xf]
    %v606 = vld [vmem:[%s9 + $0x14] sm:$0xf]
    %v607 = vld [vmem:[%s9 + $0x18] sm:$0xf]
    %v608 = vld [vmem:[%s9 + $0x1c] sm:$0xf]
    %v609 = vld [vmem:[%s9 + $0x20] sm:$0xf]
    %v610 = vld [vmem:[%s9 + $0x24] sm:$0xf]
    %v611 = vld [vmem:[%s9 + $0x28] sm:$0xf]
    %v612 = vld [vmem:[%s9 + $0x2c] sm:$0xf]
    %v613 = vld [vmem:[%s9 + $0x30] sm:$0xf]
    %v614 = vld [vmem:[%s9 + $0x34] sm:$0xf]
    %v615 = vld [vmem:[%s9 + $0x38] sm:$0xf]
    %v616 = vld [vmem:[%s9 + $0x3c] sm:$0xf]
    %v617 = vld [vmem:[%s12 + $0x7] sm:$0x1]
    %v618 = vlaneseq
    %v619 = vshrl.u32 %v618, 7
    %v620 = vsub.s32 0, %v619
    %v621 = vrot.slane %v617, %v620
    %v638 = vunpack.c.l.b16 %v601
    %v639 = vunpack.c.l.b16 %v602
    %v640 = vunpack.c.l.b16 %v603
    %v641 = vunpack.c.l.b16 %v604
    %v642 = vunpack.c.l.b16 %v605
    %v643 = vunpack.c.l.b16 %v606
    %v644 = vunpack.c.l.b16 %v607
    %v645 = vunpack.c.l.b16 %v608
    %v646 = vunpack.c.l.b16 %v609
    %v647 = vunpack.c.l.b16 %v610
    %v648 = vunpack.c.l.b16 %v611
    %v649 = vunpack.c.l.b16 %v612
    %v650 = vunpack.c.l.b16 %v613
    %v651 = vunpack.c.l.b16 %v614
    %v652 = vunpack.c.l.b16 %v615
    %v653 = vunpack.c.l.b16 %v616
    %v654 = vpack.c.b16 %v639, %v638
    %v655 = vpack.c.b16 %v641, %v640
    %v656 = vpack.c.b16 %v643, %v642
    %v657 = vpack.c.b16 %v645, %v644
    %v658 = vpack.c.b16 %v647, %v646
    %v659 = vpack.c.b16 %v649, %v648
    %v660 = vpack.c.b16 %v651, %v650
    %v661 = vpack.c.b16 %v653, %v652
    %670 = vmatprep.subr.bf16.mxu0 0
    %671 = vmatpush1.bf16.msra.mxu0 %v654
    %672 = vmatprep.subr.bf16.mxu0 0
    %673 = vmatpush1.bf16.msra.mxu0 %v655
    %674 = vmatprep.subr.bf16.mxu0 0
    %675 = vmatpush1.bf16.msra.mxu0 %v656
    %676 = vmatprep.subr.bf16.mxu0 0
    %677 = vmatpush1.bf16.msra.mxu0 %v657
    %678 = vmatprep.subr.bf16.mxu0 0
    %679 = vmatpush1.bf16.msra.mxu0 %v658
    %680 = vmatprep.subr.bf16.mxu0 0
    %681 = vmatpush1.bf16.msra.mxu0 %v659
    %682 = vmatprep.subr.bf16.mxu0 0
    %683 = vmatpush1.bf16.msra.mxu0 %v660
    %684 = vmatprep.subr.bf16.mxu0 0
    %685 = vmatpush1.bf16.msra.mxu0 %v661
    %686 = vmatprep.subr.bf16.mxu0 0
    %687 = vmatpush1.bf16.msra.mxu0 0
    %688 = vmatprep.subr.bf16.mxu0 0
    %689 = vmatpush1.bf16.msra.mxu0 0
    %690 = vmatprep.subr.bf16.mxu0 0
    %691 = vmatpush1.bf16.msra.mxu0 0
    %692 = vmatprep.subr.bf16.mxu0 0
    %693 = vmatpush1.bf16.msra.mxu0 0
    %694 = vmatprep.subr.bf16.mxu0 0
    %695 = vmatpush1.bf16.msra.mxu0 0
    %696 = vmatprep.subr.bf16.mxu0 0
    %697 = vmatpush1.bf16.msra.mxu0 0
    %698 = vmatprep.subr.bf16.mxu0 0
    %699 = vmatpush1.bf16.msra.mxu0 0
    %700 = vmatprep.subr.bf16.mxu0 0
    %701 = vmatpush1.bf16.msra.mxu0 0
    %702 = vmatprep.mubr.bf16.mxu0 0
    %703 = vmatmul.mubr.bf16.gmra.mrb[0].mxu0 %v600
    %v704 = vpop.f32.mrb[0].mxu0
    %v705 = vadd.f32 %v621, %v704
    %v706 = vpop.f32.mrb[0].mxu0
    %v707 = vpop.f32.mrb[0].mxu0
    %v708 = vadd.f32 %v621, %v707
    %v709 = vpop.f32.mrb[0].mxu0
    %710 = vdwg.mxu0
    %v711 = vadd.f32 %v514, %v705
    %v712 = vadd.f32 %v515, %v708
    %v713 = vld [vmem:[%s12 + $0x8] sm:$0x1]
    %v714 = vld [vmem:[%s12 + $0x9] sm:$0x1]
    %v715 = vsel %vm174, %v711, 0.0
    %716 = vadd.xlane.f32.xlu0 %v715
    %v717 = vpop.xlane.xlu0 %716
    %v718 = vsel %vm174, %v712, 0.0
    %719 = vadd.xlane.f32.xlu0 %v718
    %v720 = vpop.xlane.xlu0 %719
    %v721 = vmul.f32 %v717, %v181
    %v722 = vmul.f32 %v720, %v181
    %v723 = vsub.f32 %v711, %v721
    %v724 = vsub.f32 %v712, %v722
    %v725 = vmul.f32 %v723, %v723
    %v726 = vmul.f32 %v724, %v724
    %v727 = vsel %vm174, %v725, 0.0
    %728 = vadd.xlane.f32.xlu0 %v727
    %v729 = vpop.xlane.xlu0 %728
    %v730 = vsel %vm174, %v726, 0.0
    %731 = vadd.xlane.f32.xlu0 %v730
    %v732 = vpop.xlane.xlu0 %731
    %v733 = vmul.f32 %v729, %v181
    %v734 = vmul.f32 %v732, %v181
    %v735 = vadd.f32 %v733, 1e-12
    %v736 = vadd.f32 %v734, 1e-12
    %v737 = vrsqrt.pop %v735
    %v738 = vrsqrt.pop %v736
    %v739 = vmul.f32 %v723, %v737
    %v740 = vmul.f32 %v724, %v738
    %v741 = vlaneseq
    %v742 = vshrl.u32 %v741, 7
    %v743 = vsub.s32 0, %v742
    %v744 = vrot.slane %v713, %v743
    %v745 = vmul.f32 %v739, %v744
    %v746 = vmul.f32 %v740, %v744
    %v747 = vlaneseq
    %v748 = vshrl.u32 %v747, 7
    %v749 = vsub.s32 0, %v748
    %v750 = vrot.slane %v714, %v749
    %v751 = vadd.f32 %v745, %v750
    %v752 = vadd.f32 %v746, %v750
    %v753 = vld [vmem:[%s3] sm:$0x7]
    %v754 = vpack.c.bf16 %v752, %v751
    %v756 = vsel %vm337, %v753, 0
    %758 = vmatprep.subr.bf16.mxu0 0
    %759 = vmatpush1.bf16.msra.mxu0 %v754
    %760 = vmatprep.subr.bf16.mxu0 0
    %761 = vmatpush1.bf16.msra.mxu0 0
    %762 = vmatprep.subr.bf16.mxu0 0
    %763 = vmatpush1.bf16.msra.mxu0 0
    %764 = vmatprep.subr.bf16.mxu0 0
    %765 = vmatpush1.bf16.msra.mxu0 0
    %766 = vmatprep.subr.bf16.mxu0 0
    %767 = vmatpush1.bf16.msra.mxu0 0
    %768 = vmatprep.subr.bf16.mxu0 0
    %769 = vmatpush1.bf16.msra.mxu0 0
    %770 = vmatprep.subr.bf16.mxu0 0
    %771 = vmatpush1.bf16.msra.mxu0 0
    %772 = vmatprep.subr.bf16.mxu0 0
    %773 = vmatpush1.bf16.msra.mxu0 0
    %774 = vmatprep.subr.bf16.mxu0 0
    %775 = vmatpush1.bf16.msra.mxu0 0
    %776 = vmatprep.subr.bf16.mxu0 0
    %777 = vmatpush1.bf16.msra.mxu0 0
    %778 = vmatprep.subr.bf16.mxu0 0
    %779 = vmatpush1.bf16.msra.mxu0 0
    %780 = vmatprep.subr.bf16.mxu0 0
    %781 = vmatpush1.bf16.msra.mxu0 0
    %782 = vmatprep.subr.bf16.mxu0 0
    %783 = vmatpush1.bf16.msra.mxu0 0
    %784 = vmatprep.subr.bf16.mxu0 0
    %785 = vmatpush1.bf16.msra.mxu0 0
    %786 = vmatprep.subr.bf16.mxu0 0
    %787 = vmatpush1.bf16.msra.mxu0 0
    %788 = vmatprep.subr.bf16.mxu0 0
    %789 = vmatpush1.bf16.msra.mxu0 0
    %790 = vmatprep.mubr.bf16.mxu0 0
    %791 = vmatmul.mubr.bf16.gmra.mrb[0].mxu0 %v756
    %v792 = vpop.f32.mrb[0].mxu0
    %v793 = vadd.f32 0.0, %v792
    %v794 = vpop.f32.mrb[0].mxu0
    %v795 = vpop.f32.mrb[0].mxu0
    %v796 = vpop.f32.mrb[0].mxu0
    %797 = vdwg.mxu0
    %v798 = vpack.c.bf16 %v793, %v793
    %v799 = vld [vmem:[%s10] sm:$0xf]
    %v800 = vld [vmem:[%s10 + $0x4] sm:$0xf]
    %v801 = vld [vmem:[%s10 + $0x8] sm:$0xf]
    %v802 = vld [vmem:[%s10 + $0xc] sm:$0xf]
    %v803 = vld [vmem:[%s12 + $0xa] sm:$0x1]
    %v804 = vlaneseq
    %v805 = vshrl.u32 %v804, 7
    %v806 = vsub.s32 0, %v805
    %v807 = vrot.slane %v803, %v806
    %v812 = vunpack.c.l.b16 %v799
    %v813 = vunpack.c.l.b16 %v800
    %v814 = vunpack.c.l.b16 %v801
    %v815 = vunpack.c.l.b16 %v802
    %v816 = vpack.c.b16 %v813, %v812
    %v817 = vpack.c.b16 %v815, %v814
    %v821 = vsel %vm174, %v798, 0
    %823 = vmatprep.subr.bf16.mxu0 0
    %824 = vmatpush1.bf16.msra.mxu0 %v816
    %825 = vmatprep.subr.bf16.mxu0 0
    %826 = vmatpush1.bf16.msra.mxu0 %v817
    %827 = vmatprep.subr.bf16.mxu0 0
    %828 = vmatpush1.bf16.msra.mxu0 0
    %829 = vmatprep.subr.bf16.mxu0 0
    %830 = vmatpush1.bf16.msra.mxu0 0
    %831 = vmatprep.subr.bf16.mxu0 0
    %832 = vmatpush1.bf16.msra.mxu0 0
    %833 = vmatprep.subr.bf16.mxu0 0
    %834 = vmatpush1.bf16.msra.mxu0 0
    %835 = vmatprep.subr.bf16.mxu0 0
    %836 = vmatpush1.bf16.msra.mxu0 0
    %837 = vmatprep.subr.bf16.mxu0 0
    %838 = vmatpush1.bf16.msra.mxu0 0
    %839 = vmatprep.subr.bf16.mxu0 0
    %840 = vmatpush1.bf16.msra.mxu0 0
    %841 = vmatprep.subr.bf16.mxu0 0
    %842 = vmatpush1.bf16.msra.mxu0 0
    %843 = vmatprep.subr.bf16.mxu0 0
    %844 = vmatpush1.bf16.msra.mxu0 0
    %845 = vmatprep.subr.bf16.mxu0 0
    %846 = vmatpush1.bf16.msra.mxu0 0
    %847 = vmatprep.subr.bf16.mxu0 0
    %848 = vmatpush1.bf16.msra.mxu0 0
    %849 = vmatprep.subr.bf16.mxu0 0
    %850 = vmatpush1.bf16.msra.mxu0 0
    %851 = vmatprep.subr.bf16.mxu0 0
    %852 = vmatpush1.bf16.msra.mxu0 0
    %853 = vmatprep.subr.bf16.mxu0 0
    %854 = vmatpush1.bf16.msra.mxu0 0
    %855 = vmatprep.mubr.bf16.mxu0 0
    %856 = vmatmul.mubr.bf16.gmra.mrb[0].mxu0 %v821
    %v857 = vpop.f32.mrb[0].mxu0
    %v858 = vadd.f32 %v807, %v857
    %v859 = vpop.f32.mrb[0].mxu0
    %v860 = vpop.f32.mrb[0].mxu0
    %v861 = vpop.f32.mrb[0].mxu0
    %862 = vdwg.mxu0
    %v863 = vmul.f32 %v858, 0.5
    %v864 = vmul.f32 %v858, 0.044715
    %v865 = vmul.f32 %v864, %v858
    %v866 = vmul.f32 %v865, %v858
    %v867 = vadd.f32 %v858, %v866
    %v868 = vmul.f32 %v867, 0.7978846
    %v869 = vtanh.pop %v868
    %v870 = vadd.f32 %v869, 1.0
    %v871 = vmul.f32 %v863, %v870
    %v872 = vld [vmem:[%s12 + $0xb] sm:$0x1]
    %v873 = vld [vmem:[%s12 + $0xc] sm:$0x1]
    %vm874 = vcmask 259072
    %v875 = vsel %vm874, %v871, 0.0
    %876 = vadd.xlane.f32.xlu0 %v875
    %v877 = vpop.xlane.xlu0 %876
    %v878 = vmul.f32 %v877, %v181
    %v879 = vsub.f32 %v871, %v878
    %v880 = vmul.f32 %v879, %v879
    %v881 = vsel %vm874, %v880, 0.0
    %882 = vadd.xlane.f32.xlu0 %v881
    %v883 = vpop.xlane.xlu0 %882
    %v884 = vmul.f32 %v883, %v181
    %v885 = vadd.f32 %v884, 1e-12
    %v886 = vrsqrt.pop %v885
    %v887 = vmul.f32 %v879, %v886
    %v888 = vlaneseq
    %v889 = vshrl.u32 %v888, 7
    %v890 = vsub.s32 0, %v889
    %v891 = vrot.slane %v872, %v890
    %v892 = vmul.f32 %v887, %v891
    %v893 = vlaneseq
    %v894 = vshrl.u32 %v893, 7
    %v895 = vsub.s32 0, %v894
    %v896 = vrot.slane %v873, %v895
    %v897 = vadd.f32 %v892, %v896
    %v898 = vpack.c.bf16 %v897, %v897
    %v899 = vld [vmem:[%s11] sm:$0xf]
    %v900 = vld [vmem:[%s11 + $0x4] sm:$0xf]
    %v901 = vld [vmem:[%s11 + $0x8] sm:$0xf]
    %v902 = vld [vmem:[%s11 + $0xc] sm:$0xf]
    %v903 = vld [vmem:[%s12 + $0xd] sm:$0x1]
    %v904 = vlaneseq
    %v905 = vshrl.u32 %v904, 7
    %v906 = vsub.s32 0, %v905
    %v907 = vrot.slane %v903, %v906
    %v912 = vunpack.c.l.b16 %v899
    %v913 = vunpack.c.l.b16 %v900
    %v914 = vunpack.c.l.b16 %v901
    %v915 = vunpack.c.l.b16 %v902
    %v916 = vpack.c.b16 %v913, %v912
    %v917 = vpack.c.b16 %v915, %v914
    %v921 = vsel %vm174, %v898, 0
    %923 = vmatprep.subr.bf16.mxu0 0
    %924 = vmatpush1.bf16.msra.mxu0 %v916
    %925 = vmatprep.subr.bf16.mxu0 0
    %926 = vmatpush1.bf16.msra.mxu0 %v917
    %927 = vmatprep.subr.bf16.mxu0 0
    %928 = vmatpush1.bf16.msra.mxu0 0
    %929 = vmatprep.subr.bf16.mxu0 0
    %930 = vmatpush1.bf16.msra.mxu0 0
    %931 = vmatprep.subr.bf16.mxu0 0
    %932 = vmatpush1.bf16.msra.mxu0 0
    %933 = vmatprep.subr.bf16.mxu0 0
    %934 = vmatpush1.bf16.msra.mxu0 0
    %935 = vmatprep.subr.bf16.mxu0 0
    %936 = vmatpush1.bf16.msra.mxu0 0
    %937 = vmatprep.subr.bf16.mxu0 0
    %938 = vmatpush1.bf16.msra.mxu0 0
    %939 = vmatprep.subr.bf16.mxu0 0
    %940 = vmatpush1.bf16.msra.mxu0 0
    %941 = vmatprep.subr.bf16.mxu0 0
    %942 = vmatpush1.bf16.msra.mxu0 0
    %943 = vmatprep.subr.bf16.mxu0 0
    %944 = vmatpush1.bf16.msra.mxu0 0
    %945 = vmatprep.subr.bf16.mxu0 0
    %946 = vmatpush1.bf16.msra.mxu0 0
    %947 = vmatprep.subr.bf16.mxu0 0
    %948 = vmatpush1.bf16.msra.mxu0 0
    %949 = vmatprep.subr.bf16.mxu0 0
    %950 = vmatpush1.bf16.msra.mxu0 0
    %951 = vmatprep.subr.bf16.mxu0 0
    %952 = vmatpush1.bf16.msra.mxu0 0
    %953 = vmatprep.subr.bf16.mxu0 0
    %954 = vmatpush1.bf16.msra.mxu0 0
    %955 = vmatprep.mubr.bf16.mxu0 0
    %956 = vmatmul.mubr.bf16.gmra.mrb[0].mxu0 %v921
    %v957 = vpop.f32.mrb[0].mxu0
    %v958 = vadd.f32 %v907, %v957
    %v959 = vpop.f32.mrb[0].mxu0
    %v960 = vpop.f32.mrb[0].mxu0
    %v961 = vpop.f32.mrb[0].mxu0
    %962 = vdwg.mxu0
    %963 = vst [vmem:[#allocation2] sm:$0x3f] %v958
    %v964 = vld [vmem:[%s4] sm:$0x3f]
    %v965 = vadd.f32 %v958, %v964
    %vm966 = vcmask 1045504
    %v967 = vsel %vm966, %v965, -inf
    %968 = vmax.xlane.f32.xlu0 %v967
    %v969 = vpop.xlane.xlu0 %968
    %vm970 = vcmp.eq.f32.partialorder %v965, %v969
    %v971 = vsel %vm970, %v51, 128
    %v972 = vsel %vm966, %v971, 2147483647
    %v973 = vand.u32 %v972, 65535
    %v974 = vshra.s32 %v972, 16
    %v975 = vcvt.s32.f32 %v973
    %v976 = vcvt.s32.f32 %v974
    %977 = vmin.xlane.f32.xlu0 %v976
    %v978 = vpop.xlane.xlu0 %977
    %vm979 = vcmp.eq.f32.partialorder %v976, %v978
    %v980 = vsel %vm979, %v975, inf
    %981 = vmin.xlane.f32.xlu0 %v980
    %v982 = vpop.xlane.xlu0 %981
    %v983 = vcvt.f32.s32 %v982
    %v984 = vcvt.f32.s32 %v978
    %v985 = vshll.u32 %v984, 16
    %v986 = vadd.s32 %v985, %v983
    %vm987 = vcmask 5120
    %988 = vst.msk [vmem:[%s14] sm:$0x3f] %vm987, %v986
    // Predicated region
    $region54: #{electra_forward.2} parent=1 // pred_check
      _
    $region55: #{electra_forward.2} parent=1 // pred_check_branch
      %990 = sbr.rel (0) target = $region57
    $region56: #{electra_forward.2} parent=1 // pred_region
      %s992 = ssub.s32 128, 128
      %993 = vsyncadd [#allocation3], %s992
      %s995 = sshll.u32 [#allocation2], 4
      %s996 = int_to_ptr.vmem [resolvable:$true] %s995
      %998 = dma.vmem_to_hbm [thread:$0]  %s996, 128, %s13, [#allocation3]
    $region57: #{electra_forward.2} parent=1 // pred_fallthru
      _
    // Predicated region
    $region58: #{electra_forward.2} parent=1 // pred_check
      _
    $region59: #{electra_forward.2} parent=1 // pred_check_branch
      %1000 = sbr.rel (0) target = $region61
    $region60: #{electra_forward.2} parent=1 // pred_region
      _
    $region61: #{electra_forward.2} parent=1 // pred_fallthru
      _
    // Predicated region
    $region62: #{electra_forward.2} parent=1 // pred_check
      _
    $region63: #{electra_forward.2} parent=1 // pred_check_branch
      %1002 = sbr.rel (0) target = $region65
    $region64: #{electra_forward.2} parent=1 // pred_region
      %1003 = dma.done [#allocation3], 128
    $region65: #{electra_forward.2} parent=1 // pred_fallthru
      _
    // Predicated region
    $region66: #{electra_forward.2} parent=1 // pred_check
      _
    $region67: #{electra_forward.2} parent=1 // pred_check_branch
      %1005 = sbr.rel (0) target = $region69
    $region68: #{electra_forward.2} parent=1 // pred_region
      _
    $region69: #{electra_forward.2} parent=1 // pred_fallthru
      _
    %1006 = vsyncpa [#allocation3], 1

</llo_original>
